<compile_context>
chip_gen: v7x
topology: tpu7x:2x2x1
jax: 0.10.0
libtpu: 0.0.40
codegen_flags: <defaults>
</compile_context>

<pallas_src>
import math
import functools

import jax
import jax.numpy as jnp
from jax import lax
from jax.experimental import pallas as pl
from jax.experimental.pallas import tpu as pltpu

LN_EPS = 1e-5
_SQRT2 = math.sqrt(2.0)
_LANE = 128
_ACT_SLABS = 8  # assumed live [block_b, Hp] f32 slabs in the matmul+LN+GELU chain


def _round_up(n, m):
    return ((n + m - 1) // m) * m


def _cdiv(a, b):
    return -(-a // b)


def _gelu_exact(h):
    # PyTorch nn.GELU() default is the exact erf formulation.
    return 0.5 * h * (1.0 + lax.erf(h / _SQRT2))


def _layernorm_true(h, gamma, beta, lane_mask, true_dim):
    """LayerNorm over a lane-padded feature axis.

    Padded lanes of `h` are exactly zero, so the mean over the TRUE width is
    sum(h)/true_dim.  The variance uses the two-pass (h - mu)^2 form; padded
    lanes are masked out of the squared deviations.  gamma/beta are zero in
    padded lanes, so padded output lanes stay exactly zero (and GELU(0) == 0),
    letting zero-padding propagate through subsequent layers.
    """
    inv_n = 1.0 / float(true_dim)
    mu = jnp.sum(h, axis=-1, keepdims=True) * inv_n
    d = jnp.where(lane_mask, h - mu, 0.0)
    var = jnp.sum(d * d, axis=-1, keepdims=True) * inv_n
    return d * lax.rsqrt(var + LN_EPS) * gamma + beta


def actor_kernel(x_ref,
                 w1_ref, b1_ref, g1_ref, be1_ref,
                 w2_ref, b2_ref, g2_ref, be2_ref,
                 wm_ref, bm_ref,
                 mean_ref, *, true_h):
    # Hoist parameter reads once.
    b1, g1, be1 = b1_ref[...], g1_ref[...], be1_ref[...]
    b2, g2, be2 = b2_ref[...], g2_ref[...], be2_ref[...]
    bm = bm_ref[...]

    hp = g1.shape[-1]
    lane_mask = lax.broadcasted_iota(jnp.int32, (1, hp), 1) < true_h

    # bf16 operands into the MXU, f32 accumulation; elementwise math stays f32.
    # TODO(synk): if the upstream producer can emit bf16 activations, accept x
    # as bf16 to halve the input DMA and drop this VPU cast.
    x = x_ref[...].astype(jnp.bfloat16)

    # shared[0]: Linear(input_dim, hidden) + LayerNorm + GELU
    h = jnp.dot(x, w1_ref[...], preferred_element_type=jnp.float32) + b1
    h = _gelu_exact(_layernorm_true(h, g1, be1, lane_mask, true_h))

    # shared[1]: Linear(hidden, hidden) + LayerNorm + GELU
    h = jnp.dot(h.astype(jnp.bfloat16), w2_ref[...],
                preferred_element_type=jnp.float32) + b2
    h = _gelu_exact(_layernorm_true(h, g2, be2, lane_mask, true_h))

    # mean head: Linear(hidden, action_dim), lane-padded to 128 for a dense store.
    m = jnp.dot(h.astype(jnp.bfloat16), wm_ref[...],
                preferred_element_type=jnp.float32) + bm
    mean_ref[...] = m.astype(mean_ref.dtype)


def _tpu_vmem_capacity_bytes():
    """Per-TensorCore VMEM capacity; conservative default if the query fails."""
    try:
        cap = getattr(pltpu.get_tpu_info(), "vmem_capacity_bytes", None)
        if cap:
            return int(cap)
    except Exception:
        pass
    return 64 << 20  # v7x per-TC VMEM: safe lower bound


def _choose_block_b(B, max_rows, min_steps):
    """Largest 16-row-aligned (bf16 sublane pack) batch tile that fits the VMEM
    budget, using the fewest grid steps allowed by `min_steps` (>=2, even
    preferred, on two-TensorCore chips; 1 on single-TC chips where the grid is
    a serial loop and extra steps only add per-step overhead)."""
    max_rows = max(16, (max_rows // 16) * 16)
    steps = max(min_steps, _cdiv(B, max_rows))
    if min_steps >= 2 and steps % 2:
        steps += 1  # even step count keeps both TensorCores busy
    return min(max_rows, _round_up(_cdiv(B, steps), 16))


def actor_forward(x, packed, *, true_h, true_a, block_b=None,
                  single_buffer_params=True):
    """Runs the ActorNetwork forward pass.

    Args:
      x: [B, input_dim] float32
      packed: dict from pack_params() (lane-padded, bf16 matmul weights)
      true_h / true_a: logical hidden / action dims (before lane padding)
    Returns:
      (action_mean [B, true_a], log_std [B, true_a])
    """
    B, D_in = x.shape
    Hp = packed["w1"].shape[1]
    Ap = packed["wm"].shape[1]

    param_order = ("w1", "b1", "g1", "be1", "w2", "b2", "g2", "be2", "wm", "bm")
    params = [packed[k] for k in param_order]
    param_bytes = sum(int(p.size) * p.dtype.itemsize for p in params)
    param_vmem = param_bytes * (1 if single_buffer_params else 2)

    vmem_cap = _tpu_vmem_capacity_bytes()
    vmem_budget = int(0.8 * vmem_cap)            # leave compiler headroom
    multi_tc = vmem_cap <= (64 << 20) + (1 << 20)  # 64 MiB/TC heuristic => v7x (2 TCs)

    # VMEM bytes per batch row: double-buffered x / out tiles + live f32
    # activation slabs for the matmul + LN + GELU chain.
    per_row = 2 * (D_in + Ap) * 4 + _ACT_SLABS * Hp * 4
    max_rows = max(16, (vmem_budget - param_vmem - (2 << 20)) // per_row)

    if block_b is None:
        block_b = _choose_block_b(B, max_rows, 2 if multi_tc else 1)

    grid_steps = _cdiv(B, block_b)
    B_pad = grid_steps * block_b
    if B_pad != B:                                # zero-pad irregular batches
        x = jnp.pad(x, ((0, B_pad - B), (0, 0)))

    vmem_needed = param_vmem + block_b * per_row
    vmem_limit = int(min(vmem_budget, max(vmem_needed, 16 << 20)))

    batch_map = lambda i: (i, 0)
    rep_map = lambda i: (0, 0)

    def param_spec(arr):
        # Grid-invariant parameters: single buffer halves their VMEM footprint
        # (critical for v7x at large hidden dims, frees VMEM for fatter batch
        # tiles on v5e/v6e).
        if single_buffer_params:
            return pl.BlockSpec(arr.shape, rep_map, pipeline_mode=pl.Buffered(1))
        return pl.BlockSpec(arr.shape, rep_map)

    cost = pl.CostEstimate(
        flops=2 * B_pad * (D_in * Hp + Hp * Hp + Hp * Ap) + 24 * B_pad * Hp,
        transcendentals=0,          # lax.erf lowers to a VPU polynomial, not an EUP op
        bytes_accessed=B_pad * (D_in + Ap) * 4 + param_bytes,
    )

    mean_padded = pl.pallas_call(
        functools.partial(actor_kernel, true_h=true_h),
        out_shape=jax.ShapeDtypeStruct((B_pad, Ap), jnp.float32),
        grid=(grid_steps,),
        in_specs=[pl.BlockSpec((block_b, D_in), batch_map)]
                 + [param_spec(p) for p in params],
        out_specs=pl.BlockSpec((block_b, Ap), batch_map),
        compiler_params=pltpu.CompilerParams(
            dimension_semantics=("parallel",),
            vmem_limit_bytes=vmem_limit),
        cost_estimate=cost,
    )(x, *params)

    # TODO(synk): for very large B with tiny action_dim, defer/fuse this slice
    # into the consumer (or emit bf16) to avoid a second pass over the padded
    # output array; kept here for a self-contained, exact-shape result.
    mean = mean_padded[:B, :true_a]
    # log_std head: nn.Parameter(zeros(action_dim)).expand(B, -1) — pure
    # broadcast, no compute, kept in plain JAX glue.
    log_std = jnp.broadcast_to(packed["log_std"].reshape(1, true_a), (B, true_a))
    return mean, log_std


def init_params(key, input_dim, hidden_dim, action_dim):
    """Deterministic synthetic init (PyTorch-style uniform fan-in bounds).
    Weights stored [in_features, out_features] so the hot path is x @ W."""
    ks = jax.random.split(key, 6)

    def linear(kw, kb, fan_in, fan_out):
        bound = 1.0 / math.sqrt(fan_in)
        w = jax.random.uniform(kw, (fan_in, fan_out), jnp.float32, -bound, bound)
        b = jax.random.uniform(kb, (1, fan_out), jnp.float32, -bound, bound)
        return w, b

    w1, b1 = linear(ks[0], ks[1], input_dim, hidden_dim)
    w2, b2 = linear(ks[2], ks[3], hidden_dim, hidden_dim)
    wm, bm = linear(ks[4], ks[5], hidden_dim, action_dim)
    return dict(
        w1=w1, b1=b1,
        g1=jnp.ones((1, hidden_dim), jnp.float32),
        be1=jnp.zeros((1, hidden_dim), jnp.float32),
        w2=w2, b2=b2,
        g2=jnp.ones((1, hidden_dim), jnp.float32),
        be2=jnp.zeros((1, hidden_dim), jnp.float32),
        wm=wm, bm=bm,
        log_std=jnp.zeros((action_dim,), jnp.float32),
    )


def pack_params(p):
    """Zero-pad feature dims to 128-lane multiples; cast matmul weights to bf16."""
    d_in, h = p["w1"].shape
    a = p["wm"].shape[1]
    hp, ap = _round_up(h, _LANE), _round_up(a, _LANE)

    def pad2(arr, rows, cols):
        return jnp.pad(arr, ((0, rows - arr.shape[0]), (0, cols - arr.shape[1])))

    return dict(
        w1=pad2(p["w1"], d_in, hp).astype(jnp.bfloat16),
        b1=pad2(p["b1"], 1, hp),
        g1=pad2(p["g1"], 1, hp),
        be1=pad2(p["be1"], 1, hp),
        w2=pad2(p["w2"], hp, hp).astype(jnp.bfloat16),
        b2=pad2(p["b2"], 1, hp),
        g2=pad2(p["g2"], 1, hp),
        be2=pad2(p["be2"], 1, hp),
        wm=pad2(p["wm"], hp, ap).astype(jnp.bfloat16),
        bm=pad2(p["bm"], 1, ap),
        log_std=p["log_std"],
    )


def _layernorm_ref(h, gamma, beta):
    mu = jnp.mean(h, axis=-1, keepdims=True)
    var = jnp.mean((h - mu) * (h - mu), axis=-1, keepdims=True)
    return (h - mu) * lax.rsqrt(var + LN_EPS) * gamma + beta


def reference_forward(x, p):
    """Plain-JAX f32 reference mirroring the PyTorch module."""
    h = x @ p["w1"] + p["b1"]
    h = _gelu_exact(_layernorm_ref(h, p["g1"], p["be1"]))
    h = h @ p["w2"] + p["b2"]
    h = _gelu_exact(_layernorm_ref(h, p["g2"], p["be2"]))
    m = h @ p["wm"] + p["bm"]
    ls = jnp.broadcast_to(p["log_std"].reshape(1, -1),
                          (x.shape[0], p["wm"].shape[1]))
    return m, ls


if __name__ == "__main__":
    # Small demo shapes consistent with the module (batch, input_dim, hidden, action).
    B, INPUT_DIM, HIDDEN_DIM, ACTION_DIM = 16, 16, 32, 8

    key = jax.random.PRNGKey(0)
    k_x, k_p = jax.random.split(key)
    x = jax.random.normal(k_x, (B, INPUT_DIM), jnp.float32)
    params = init_params(k_p, INPUT_DIM, HIDDEN_DIM, ACTION_DIM)
    packed = pack_params(params)

    def run(single_buffer):
        fwd = jax.jit(functools.partial(
            actor_forward, true_h=HIDDEN_DIM, true_a=ACTION_DIM,
            single_buffer_params=single_buffer))
        mean, log_std = fwd(x, packed)
        jax.block_until_ready(mean)
        jax.block_until_ready(log_std)
        return mean, log_std

    try:
        mean, log_std = run(True)
    except Exception:
        # Fallback: this jax build rejects single-buffered (Buffered(1)) param
        # specs — rerun with default double buffering so the kernel still runs.
        mean, log_std = run(False)

    ref_mean, ref_log_std = reference_forward(x, params)
    assert mean.shape == (B, ACTION_DIM) and log_std.shape == (B, ACTION_DIM)
    # bf16 MXU operands with f32 accumulation vs a pure-f32 reference.
    assert jnp.allclose(mean, ref_mean, atol=2e-2, rtol=2e-2), \
        float(jnp.max(jnp.abs(mean - ref_mean)))
    assert jnp.allclose(log_std, ref_log_std)

    print("KERNEL_OK")
</pallas_src>

<mosaic_0001>
module attributes {stable_mosaic.version = 11 : i64} {
  func.func @actor_kernel(%arg0: i32, %arg1: memref<16x16xf32, #tpu.memory_space<vmem>>, %arg2: memref<16x128xbf16, #tpu.memory_space<vmem>>, %arg3: memref<1x128xf32, #tpu.memory_space<vmem>>, %arg4: memref<1x128xf32, #tpu.memory_space<vmem>>, %arg5: memref<1x128xf32, #tpu.memory_space<vmem>>, %arg6: memref<128x128xbf16, #tpu.memory_space<vmem>>, %arg7: memref<1x128xf32, #tpu.memory_space<vmem>>, %arg8: memref<1x128xf32, #tpu.memory_space<vmem>>, %arg9: memref<1x128xf32, #tpu.memory_space<vmem>>, %arg10: memref<128x128xbf16, #tpu.memory_space<vmem>>, %arg11: memref<1x128xf32, #tpu.memory_space<vmem>>, %arg12: memref<16x128xf32, #tpu.memory_space<vmem>>) attributes {dimension_semantics = [#tpu.dimension_semantics<parallel>], iteration_bounds = array<i64: 1>, scalar_prefetch = 0 : i64, scratch_operands = 0 : i64, tpu.core_type = #tpu.core_type<tc>, window_params = [{transform_indices = @transform_0, window_bounds = array<i64: 16, 16>}, {pipeline_mode = #tpu.pipeline_mode<synchronous>, transform_indices = @transform_1, window_bounds = array<i64: 16, 128>}, {pipeline_mode = #tpu.pipeline_mode<synchronous>, transform_indices = @transform_2, window_bounds = array<i64: 1, 128>}, {pipeline_mode = #tpu.pipeline_mode<synchronous>, transform_indices = @transform_3, window_bounds = array<i64: 1, 128>}, {pipeline_mode = #tpu.pipeline_mode<synchronous>, transform_indices = @transform_4, window_bounds = array<i64: 1, 128>}, {pipeline_mode = #tpu.pipeline_mode<synchronous>, transform_indices = @transform_5, window_bounds = array<i64: 128, 128>}, {pipeline_mode = #tpu.pipeline_mode<synchronous>, transform_indices = @transform_6, window_bounds = array<i64: 1, 128>}, {pipeline_mode = #tpu.pipeline_mode<synchronous>, transform_indices = @transform_7, window_bounds = array<i64: 1, 128>}, {pipeline_mode = #tpu.pipeline_mode<synchronous>, transform_indices = @transform_8, window_bounds = array<i64: 1, 128>}, {pipeline_mode = #tpu.pipeline_mode<synchronous>, transform_indices = @transform_9, window_bounds = array<i64: 128, 128>}, {pipeline_mode = #tpu.pipeline_mode<synchronous>, transform_indices = @transform_10, window_bounds = array<i64: 1, 128>}, {transform_indices = @transform_11, window_bounds = array<i64: 16, 128>}]} {
    %c0 = arith.constant 0 : index
    %c0_0 = arith.constant 0 : index
    %0 = vector.load %arg3[%c0, %c0_0] : memref<1x128xf32, #tpu.memory_space<vmem>>, vector<1x128xf32>
    %c0_1 = arith.constant 0 : index
    %c0_2 = arith.constant 0 : index
    %1 = vector.load %arg4[%c0_1, %c0_2] : memref<1x128xf32, #tpu.memory_space<vmem>>, vector<1x128xf32>
    %c0_3 = arith.constant 0 : index
    %c0_4 = arith.constant 0 : index
    %2 = vector.load %arg5[%c0_3, %c0_4] : memref<1x128xf32, #tpu.memory_space<vmem>>, vector<1x128xf32>
    %c0_5 = arith.constant 0 : index
    %c0_6 = arith.constant 0 : index
    %3 = vector.load %arg7[%c0_5, %c0_6] : memref<1x128xf32, #tpu.memory_space<vmem>>, vector<1x128xf32>
    %c0_7 = arith.constant 0 : index
    %c0_8 = arith.constant 0 : index
    %4 = vector.load %arg8[%c0_7, %c0_8] : memref<1x128xf32, #tpu.memory_space<vmem>>, vector<1x128xf32>
    %c0_9 = arith.constant 0 : index
    %c0_10 = arith.constant 0 : index
    %5 = vector.load %arg9[%c0_9, %c0_10] : memref<1x128xf32, #tpu.memory_space<vmem>>, vector<1x128xf32>
    %c0_11 = arith.constant 0 : index
    %c0_12 = arith.constant 0 : index
    %6 = vector.load %arg11[%c0_11, %c0_12] : memref<1x128xf32, #tpu.memory_space<vmem>>, vector<1x128xf32>
    %7 = tpu.iota {dimensions = array<i32: 1>} : vector<1x128xi32>
    %c32_i32 = arith.constant 32 : i32
    %8 = vector.broadcast %c32_i32 : i32 to vector<1x128xi32>
    %9 = arith.cmpi slt, %7, %8 : vector<1x128xi32>
    %c0_13 = arith.constant 0 : index
    %c0_14 = arith.constant 0 : index
    %10 = vector.load %arg1[%c0_13, %c0_14] : memref<16x16xf32, #tpu.memory_space<vmem>>, vector<16x16xf32>
    %11 = arith.truncf %10 : vector<16x16xf32> to vector<16x16xbf16>
    %c0_15 = arith.constant 0 : index
    %c0_16 = arith.constant 0 : index
    %12 = vector.load %arg2[%c0_15, %c0_16] : memref<16x128xbf16, #tpu.memory_space<vmem>>, vector<16x128xbf16>
    %cst = arith.constant dense<0.000000e+00> : vector<16x128xf32>
    %13 = tpu.matmul %11, %12, %cst {dimension_numbers = #tpu.dot_dimension_numbers<[1], [0], [0], [1], [0, 0, 1, 1], [], []>} : vector<16x16xbf16>, vector<16x128xbf16>, vector<16x128xf32> -> vector<16x128xf32>
    %14 = vector.broadcast %0 : vector<1x128xf32> to vector<16x128xf32>
    %15 = arith.addf %13, %14 : vector<16x128xf32>
    %cst_17 = arith.constant dense<0.000000e+00> : vector<16xf32>
    %16 = vector.multi_reduction <add>, %15, %cst_17 [1] : vector<16x128xf32> to vector<16xf32>
    %17 = vector.shape_cast %16 : vector<16xf32> to vector<16x1xf32>
    %cst_18 = arith.constant 3.125000e-02 : f32
    %18 = vector.broadcast %cst_18 : f32 to vector<16x1xf32>
    %19 = arith.mulf %17, %18 : vector<16x1xf32>
    %20 = vector.broadcast %19 : vector<16x1xf32> to vector<16x128xf32>
    %21 = arith.subf %15, %20 : vector<16x128xf32>
    %cst_19 = arith.constant 0.000000e+00 : f32
    %22 = vector.shape_cast %9 : vector<1x128xi1> to vector<1x128xi1>
    %23 = vector.broadcast %22 : vector<1x128xi1> to vector<16x128xi1>
    %24 = vector.broadcast %cst_19 : f32 to vector<16x128xf32>
    %25 = arith.select %23, %21, %24 : vector<16x128xi1>, vector<16x128xf32>
    %26 = arith.mulf %25, %25 : vector<16x128xf32>
    %cst_20 = arith.constant dense<0.000000e+00> : vector<16xf32>
    %27 = vector.multi_reduction <add>, %26, %cst_20 [1] : vector<16x128xf32> to vector<16xf32>
    %28 = vector.shape_cast %27 : vector<16xf32> to vector<16x1xf32>
    %cst_21 = arith.constant 3.125000e-02 : f32
    %29 = vector.broadcast %cst_21 : f32 to vector<16x1xf32>
    %30 = arith.mulf %28, %29 : vector<16x1xf32>
    %cst_22 = arith.constant 9.99999974E-6 : f32
    %31 = vector.broadcast %cst_22 : f32 to vector<16x1xf32>
    %32 = arith.addf %30, %31 : vector<16x1xf32>
    %33 = math.rsqrt %32 : vector<16x1xf32>
    %34 = vector.broadcast %33 : vector<16x1xf32> to vector<16x128xf32>
    %35 = arith.mulf %25, %34 : vector<16x128xf32>
    %36 = vector.broadcast %1 : vector<1x128xf32> to vector<16x128xf32>
    %37 = arith.mulf %35, %36 : vector<16x128xf32>
    %38 = vector.broadcast %2 : vector<1x128xf32> to vector<16x128xf32>
    %39 = arith.addf %37, %38 : vector<16x128xf32>
    %cst_23 = arith.constant 5.000000e-01 : f32
    %40 = vector.broadcast %cst_23 : f32 to vector<16x128xf32>
    %41 = arith.mulf %40, %39 : vector<16x128xf32>
    %cst_24 = arith.constant 1.41421354 : f32
    %42 = vector.broadcast %cst_24 : f32 to vector<16x128xf32>
    %43 = arith.divf %39, %42 : vector<16x128xf32>
    %44 = math.erf %43 : vector<16x128xf32>
    %cst_25 = arith.constant 1.000000e+00 : f32
    %45 = vector.broadcast %cst_25 : f32 to vector<16x128xf32>
    %46 = arith.addf %45, %44 : vector<16x128xf32>
    %47 = arith.mulf %41, %46 : vector<16x128xf32>
    %48 = arith.truncf %47 : vector<16x128xf32> to vector<16x128xbf16>
    %c0_26 = arith.constant 0 : index
    %c0_27 = arith.constant 0 : index
    %49 = vector.load %arg6[%c0_26, %c0_27] : memref<128x128xbf16, #tpu.memory_space<vmem>>, vector<128x128xbf16>
    %cst_28 = arith.constant dense<0.000000e+00> : vector<16x128xf32>
    %50 = tpu.matmul %48, %49, %cst_28 {dimension_numbers = #tpu.dot_dimension_numbers<[1], [0], [0], [1], [0, 0, 1, 1], [], []>} : vector<16x128xbf16>, vector<128x128xbf16>, vector<16x128xf32> -> vector<16x128xf32>
    %51 = vector.broadcast %3 : vector<1x128xf32> to vector<16x128xf32>
    %52 = arith.addf %50, %51 : vector<16x128xf32>
    %cst_29 = arith.constant dense<0.000000e+00> : vector<16xf32>
    %53 = vector.multi_reduction <add>, %52, %cst_29 [1] : vector<16x128xf32> to vector<16xf32>
    %54 = vector.shape_cast %53 : vector<16xf32> to vector<16x1xf32>
    %cst_30 = arith.constant 3.125000e-02 : f32
    %55 = vector.broadcast %cst_30 : f32 to vector<16x1xf32>
    %56 = arith.mulf %54, %55 : vector<16x1xf32>
    %57 = vector.broadcast %56 : vector<16x1xf32> to vector<16x128xf32>
    %58 = arith.subf %52, %57 : vector<16x128xf32>
    %cst_31 = arith.constant 0.000000e+00 : f32
    %59 = vector.shape_cast %9 : vector<1x128xi1> to vector<1x128xi1>
    %60 = vector.broadcast %59 : vector<1x128xi1> to vector<16x128xi1>
    %61 = vector.broadcast %cst_31 : f32 to vector<16x128xf32>
    %62 = arith.select %60, %58, %61 : vector<16x128xi1>, vector<16x128xf32>
    %63 = arith.mulf %62, %62 : vector<16x128xf32>
    %cst_32 = arith.constant dense<0.000000e+00> : vector<16xf32>
    %64 = vector.multi_reduction <add>, %63, %cst_32 [1] : vector<16x128xf32> to vector<16xf32>
    %65 = vector.shape_cast %64 : vector<16xf32> to vector<16x1xf32>
    %cst_33 = arith.constant 3.125000e-02 : f32
    %66 = vector.broadcast %cst_33 : f32 to vector<16x1xf32>
    %67 = arith.mulf %65, %66 : vector<16x1xf32>
    %cst_34 = arith.constant 9.99999974E-6 : f32
    %68 = vector.broadcast %cst_34 : f32 to vector<16x1xf32>
    %69 = arith.addf %67, %68 : vector<16x1xf32>
    %70 = math.rsqrt %69 : vector<16x1xf32>
    %71 = vector.broadcast %70 : vector<16x1xf32> to vector<16x128xf32>
    %72 = arith.mulf %62, %71 : vector<16x128xf32>
    %73 = vector.broadcast %4 : vector<1x128xf32> to vector<16x128xf32>
    %74 = arith.mulf %72, %73 : vector<16x128xf32>
    %75 = vector.broadcast %5 : vector<1x128xf32> to vector<16x128xf32>
    %76 = arith.addf %74, %75 : vector<16x128xf32>
    %cst_35 = arith.constant 5.000000e-01 : f32
    %77 = vector.broadcast %cst_35 : f32 to vector<16x128xf32>
    %78 = arith.mulf %77, %76 : vector<16x128xf32>
    %cst_36 = arith.constant 1.41421354 : f32
    %79 = vector.broadcast %cst_36 : f32 to vector<16x128xf32>
    %80 = arith.divf %76, %79 : vector<16x128xf32>
    %81 = math.erf %80 : vector<16x128xf32>
    %cst_37 = arith.constant 1.000000e+00 : f32
    %82 = vector.broadcast %cst_37 : f32 to vector<16x128xf32>
    %83 = arith.addf %82, %81 : vector<16x128xf32>
    %84 = arith.mulf %78, %83 : vector<16x128xf32>
    %85 = arith.truncf %84 : vector<16x128xf32> to vector<16x128xbf16>
    %c0_38 = arith.constant 0 : index
    %c0_39 = arith.constant 0 : index
    %86 = vector.load %arg10[%c0_38, %c0_39] : memref<128x128xbf16, #tpu.memory_space<vmem>>, vector<128x128xbf16>
    %cst_40 = arith.constant dense<0.000000e+00> : vector<16x128xf32>
    %87 = tpu.matmul %85, %86, %cst_40 {dimension_numbers = #tpu.dot_dimension_numbers<[1], [0], [0], [1], [0, 0, 1, 1], [], []>} : vector<16x128xbf16>, vector<128x128xbf16>, vector<16x128xf32> -> vector<16x128xf32>
    %88 = vector.broadcast %6 : vector<1x128xf32> to vector<16x128xf32>
    %89 = arith.addf %87, %88 : vector<16x128xf32>
    %c0_41 = arith.constant 0 : index
    %c0_42 = arith.constant 0 : index
    %90 = vector.load %arg12[%c0_41, %c0_42] : memref<16x128xf32, #tpu.memory_space<vmem>>, vector<16x128xf32>
    tpu.vector_store %arg12[%c0_41, %c0_42], %89 {strides = array<i32>} : memref<16x128xf32, #tpu.memory_space<vmem>>, vector<16x128xf32>,
    return
  }
  func.func @transform_0(%arg0: i32) -> (i32, i32) {
    %c0_i32 = arith.constant 0 : i32
    %c0_i32_0 = arith.constant 0 : i32
    return %arg0, %c0_i32 : i32, i32
  }
  func.func @transform_1(%arg0: i32) -> (i32, i32) {
    %c0_i32 = arith.constant 0 : i32
    %c0_i32_0 = arith.constant 0 : i32
    %c0_i32_1 = arith.constant 0 : i32
    return %c0_i32, %c0_i32_0 : i32, i32
  }
  func.func @transform_2(%arg0: i32) -> (i32, i32) {
    %c0_i32 = arith.constant 0 : i32
    %c0_i32_0 = arith.constant 0 : i32
    %c0_i32_1 = arith.constant 0 : i32
    return %c0_i32, %c0_i32_0 : i32, i32
  }
  func.func @transform_3(%arg0: i32) -> (i32, i32) {
    %c0_i32 = arith.constant 0 : i32
    %c0_i32_0 = arith.constant 0 : i32
    %c0_i32_1 = arith.constant 0 : i32
    return %c0_i32, %c0_i32_0 : i32, i32
  }
  func.func @transform_4(%arg0: i32) -> (i32, i32) {
    %c0_i32 = arith.constant 0 : i32
    %c0_i32_0 = arith.constant 0 : i32
    %c0_i32_1 = arith.constant 0 : i32
    return %c0_i32, %c0_i32_0 : i32, i32
  }
  func.func @transform_5(%arg0: i32) -> (i32, i32) {
    %c0_i32 = arith.constant 0 : i32
    %c0_i32_0 = arith.constant 0 : i32
    %c0_i32_1 = arith.constant 0 : i32
    return %c0_i32, %c0_i32_0 : i32, i32
  }
  func.func @transform_6(%arg0: i32) -> (i32, i32) {
    %c0_i32 = arith.constant 0 : i32
    %c0_i32_0 = arith.constant 0 : i32
    %c0_i32_1 = arith.constant 0 : i32
    return %c0_i32, %c0_i32_0 : i32, i32
  }
  func.func @transform_7(%arg0: i32) -> (i32, i32) {
    %c0_i32 = arith.constant 0 : i32
    %c0_i32_0 = arith.constant 0 : i32
    %c0_i32_1 = arith.constant 0 : i32
    return %c0_i32, %c0_i32_0 : i32, i32
  }
  func.func @transform_8(%arg0: i32) -> (i32, i32) {
    %c0_i32 = arith.constant 0 : i32
    %c0_i32_0 = arith.constant 0 : i32
    %c0_i32_1 = arith.constant 0 : i32
    return %c0_i32, %c0_i32_0 : i32, i32
  }
  func.func @transform_9(%arg0: i32) -> (i32, i32) {
    %c0_i32 = arith.constant 0 : i32
    %c0_i32_0 = arith.constant 0 : i32
    %c0_i32_1 = arith.constant 0 : i32
    return %c0_i32, %c0_i32_0 : i32, i32
  }
  func.func @transform_10(%arg0: i32) -> (i32, i32) {
    %c0_i32 = arith.constant 0 : i32
    %c0_i32_0 = arith.constant 0 : i32
    %c0_i32_1 = arith.constant 0 : i32
    return %c0_i32, %c0_i32_0 : i32, i32
  }
  func.func @transform_11(%arg0: i32) -> (i32, i32) {
    %c0_i32 = arith.constant 0 : i32
    %c0_i32_0 = arith.constant 0 : i32
    return %arg0, %c0_i32 : i32, i32
  }
}

module attributes {stable_mosaic.version = 11 : i64} {
  func.func @actor_kernel(%arg0: i32, %arg1: memref<16x16xf32, #tpu.memory_space<vmem>>, %arg2: memref<16x128xbf16, #tpu.memory_space<vmem>>, %arg3: memref<1x128xf32, #tpu.memory_space<vmem>>, %arg4: memref<1x128xf32, #tpu.memory_space<vmem>>, %arg5: memref<1x128xf32, #tpu.memory_space<vmem>>, %arg6: memref<128x128xbf16, #tpu.memory_space<vmem>>, %arg7: memref<1x128xf32, #tpu.memory_space<vmem>>, %arg8: memref<1x128xf32, #tpu.memory_space<vmem>>, %arg9: memref<1x128xf32, #tpu.memory_space<vmem>>, %arg10: memref<128x128xbf16, #tpu.memory_space<vmem>>, %arg11: memref<1x128xf32, #tpu.memory_space<vmem>>, %arg12: memref<16x128xf32, #tpu.memory_space<vmem>>) attributes {dimension_semantics = [#tpu.dimension_semantics<parallel>], iteration_bounds = array<i64: 1>, scalar_prefetch = 0 : i64, scratch_operands = 0 : i64, tpu.core_type = #tpu.core_type<tc>, window_params = [{transform_indices = @transform_0, window_bounds = array<i64: 16, 16>}, {pipeline_mode = #tpu.pipeline_mode<synchronous>, transform_indices = @transform_1, window_bounds = array<i64: 16, 128>}, {pipeline_mode = #tpu.pipeline_mode<synchronous>, transform_indices = @transform_2, window_bounds = array<i64: 1, 128>}, {pipeline_mode = #tpu.pipeline_mode<synchronous>, transform_indices = @transform_3, window_bounds = array<i64: 1, 128>}, {pipeline_mode = #tpu.pipeline_mode<synchronous>, transform_indices = @transform_4, window_bounds = array<i64: 1, 128>}, {pipeline_mode = #tpu.pipeline_mode<synchronous>, transform_indices = @transform_5, window_bounds = array<i64: 128, 128>}, {pipeline_mode = #tpu.pipeline_mode<synchronous>, transform_indices = @transform_6, window_bounds = array<i64: 1, 128>}, {pipeline_mode = #tpu.pipeline_mode<synchronous>, transform_indices = @transform_7, window_bounds = array<i64: 1, 128>}, {pipeline_mode = #tpu.pipeline_mode<synchronous>, transform_indices = @transform_8, window_bounds = array<i64: 1, 128>}, {pipeline_mode = #tpu.pipeline_mode<synchronous>, transform_indices = @transform_9, window_bounds = array<i64: 128, 128>}, {pipeline_mode = #tpu.pipeline_mode<synchronous>, transform_indices = @transform_10, window_bounds = array<i64: 1, 128>}, {transform_indices = @transform_11, window_bounds = array<i64: 16, 128>}]} {
    %c0 = arith.constant 0 : index
    %c0_0 = arith.constant 0 : index
    %0 = vector.load %arg3[%c0, %c0_0] : memref<1x128xf32, #tpu.memory_space<vmem>>, vector<1x128xf32>
    %c0_1 = arith.constant 0 : index
    %c0_2 = arith.constant 0 : index
    %1 = vector.load %arg4[%c0_1, %c0_2] : memref<1x128xf32, #tpu.memory_space<vmem>>, vector<1x128xf32>
    %c0_3 = arith.constant 0 : index
    %c0_4 = arith.constant 0 : index
    %2 = vector.load %arg5[%c0_3, %c0_4] : memref<1x128xf32, #tpu.memory_space<vmem>>, vector<1x128xf32>
    %c0_5 = arith.constant 0 : index
    %c0_6 = arith.constant 0 : index
    %3 = vector.load %arg7[%c0_5, %c0_6] : memref<1x128xf32, #tpu.memory_space<vmem>>, vector<1x128xf32>
    %c0_7 = arith.constant 0 : index
    %c0_8 = arith.constant 0 : index
    %4 = vector.load %arg8[%c0_7, %c0_8] : memref<1x128xf32, #tpu.memory_space<vmem>>, vector<1x128xf32>
    %c0_9 = arith.constant 0 : index
    %c0_10 = arith.constant 0 : index
    %5 = vector.load %arg9[%c0_9, %c0_10] : memref<1x128xf32, #tpu.memory_space<vmem>>, vector<1x128xf32>
    %c0_11 = arith.constant 0 : index
    %c0_12 = arith.constant 0 : index
    %6 = vector.load %arg11[%c0_11, %c0_12] : memref<1x128xf32, #tpu.memory_space<vmem>>, vector<1x128xf32>
    %7 = tpu.iota {dimensions = array<i32: 1>} : vector<1x128xi32>
    %c32_i32 = arith.constant 32 : i32
    %8 = vector.broadcast %c32_i32 : i32 to vector<1x128xi32>
    %9 = arith.cmpi slt, %7, %8 : vector<1x128xi32>
    %c0_13 = arith.constant 0 : index
    %c0_14 = arith.constant 0 : index
    %10 = vector.load %arg1[%c0_13, %c0_14] : memref<16x16xf32, #tpu.memory_space<vmem>>, vector<16x16xf32>
    %11 = arith.truncf %10 : vector<16x16xf32> to vector<16x16xbf16>
    %c0_15 = arith.constant 0 : index
    %c0_16 = arith.constant 0 : index
    %12 = vector.load %arg2[%c0_15, %c0_16] : memref<16x128xbf16, #tpu.memory_space<vmem>>, vector<16x128xbf16>
    %cst = arith.constant dense<0.000000e+00> : vector<16x128xf32>
    %13 = tpu.matmul %11, %12, %cst {dimension_numbers = #tpu.dot_dimension_numbers<[1], [0], [0], [1], [0, 0, 1, 1], [], []>} : vector<16x16xbf16>, vector<16x128xbf16>, vector<16x128xf32> -> vector<16x128xf32>
    %14 = vector.broadcast %0 : vector<1x128xf32> to vector<16x128xf32>
    %15 = arith.addf %13, %14 : vector<16x128xf32>
    %cst_17 = arith.constant dense<0.000000e+00> : vector<16xf32>
    %16 = vector.multi_reduction <add>, %15, %cst_17 [1] : vector<16x128xf32> to vector<16xf32>
    %17 = vector.shape_cast %16 : vector<16xf32> to vector<16x1xf32>
    %cst_18 = arith.constant 3.125000e-02 : f32
    %18 = vector.broadcast %cst_18 : f32 to vector<16x1xf32>
    %19 = arith.mulf %17, %18 : vector<16x1xf32>
    %20 = vector.broadcast %19 : vector<16x1xf32> to vector<16x128xf32>
    %21 = arith.subf %15, %20 : vector<16x128xf32>
    %cst_19 = arith.constant 0.000000e+00 : f32
    %22 = vector.shape_cast %9 : vector<1x128xi1> to vector<1x128xi1>
    %23 = vector.broadcast %22 : vector<1x128xi1> to vector<16x128xi1>
    %24 = vector.broadcast %cst_19 : f32 to vector<16x128xf32>
    %25 = arith.select %23, %21, %24 : vector<16x128xi1>, vector<16x128xf32>
    %26 = arith.mulf %25, %25 : vector<16x128xf32>
    %cst_20 = arith.constant dense<0.000000e+00> : vector<16xf32>
    %27 = vector.multi_reduction <add>, %26, %cst_20 [1] : vector<16x128xf32> to vector<16xf32>
    %28 = vector.shape_cast %27 : vector<16xf32> to vector<16x1xf32>
    %cst_21 = arith.constant 3.125000e-02 : f32
    %29 = vector.broadcast %cst_21 : f32 to vector<16x1xf32>
    %30 = arith.mulf %28, %29 : vector<16x1xf32>
    %cst_22 = arith.constant 9.99999974E-6 : f32
    %31 = vector.broadcast %cst_22 : f32 to vector<16x1xf32>
    %32 = arith.addf %30, %31 : vector<16x1xf32>
    %33 = math.rsqrt %32 : vector<16x1xf32>
    %34 = vector.broadcast %33 : vector<16x1xf32> to vector<16x128xf32>
    %35 = arith.mulf %25, %34 : vector<16x128xf32>
    %36 = vector.broadcast %1 : vector<1x128xf32> to vector<16x128xf32>
    %37 = arith.mulf %35, %36 : vector<16x128xf32>
    %38 = vector.broadcast %2 : vector<1x128xf32> to vector<16x128xf32>
    %39 = arith.addf %37, %38 : vector<16x128xf32>
    %cst_23 = arith.constant 5.000000e-01 : f32
    %40 = vector.broadcast %cst_23 : f32 to vector<16x128xf32>
    %41 = arith.mulf %40, %39 : vector<16x128xf32>
    %cst_24 = arith.constant 1.41421354 : f32
    %42 = vector.broadcast %cst_24 : f32 to vector<16x128xf32>
    %43 = arith.divf %39, %42 : vector<16x128xf32>
    %44 = math.erf %43 : vector<16x128xf32>
    %cst_25 = arith.constant 1.000000e+00 : f32
    %45 = vector.broadcast %cst_25 : f32 to vector<16x128xf32>
    %46 = arith.addf %45, %44 : vector<16x128xf32>
    %47 = arith.mulf %41, %46 : vector<16x128xf32>
    %48 = arith.truncf %47 : vector<16x128xf32> to vector<16x128xbf16>
    %c0_26 = arith.constant 0 : index
    %c0_27 = arith.constant 0 : index
    %49 = vector.load %arg6[%c0_26, %c0_27] : memref<128x128xbf16, #tpu.memory_space<vmem>>, vector<128x128xbf16>
    %cst_28 = arith.constant dense<0.000000e+00> : vector<16x128xf32>
    %50 = tpu.matmul %48, %49, %cst_28 {dimension_numbers = #tpu.dot_dimension_numbers<[1], [0], [0], [1], [0, 0, 1, 1], [], []>} : vector<16x128xbf16>, vector<128x128xbf16>, vector<16x128xf32> -> vector<16x128xf32>
    %51 = vector.broadcast %3 : vector<1x128xf32> to vector<16x128xf32>
    %52 = arith.addf %50, %51 : vector<16x128xf32>
    %cst_29 = arith.constant dense<0.000000e+00> : vector<16xf32>
    %53 = vector.multi_reduction <add>, %52, %cst_29 [1] : vector<16x128xf32> to vector<16xf32>
    %54 = vector.shape_cast %53 : vector<16xf32> to vector<16x1xf32>
    %cst_30 = arith.constant 3.125000e-02 : f32
    %55 = vector.broadcast %cst_30 : f32 to vector<16x1xf32>
    %56 = arith.mulf %54, %55 : vector<16x1xf32>
    %57 = vector.broadcast %56 : vector<16x1xf32> to vector<16x128xf32>
    %58 = arith.subf %52, %57 : vector<16x128xf32>
    %cst_31 = arith.constant 0.000000e+00 : f32
    %59 = vector.shape_cast %9 : vector<1x128xi1> to vector<1x128xi1>
    %60 = vector.broadcast %59 : vector<1x128xi1> to vector<16x128xi1>
    %61 = vector.broadcast %cst_31 : f32 to vector<16x128xf32>
    %62 = arith.select %60, %58, %61 : vector<16x128xi1>, vector<16x128xf32>
    %63 = arith.mulf %62, %62 : vector<16x128xf32>
    %cst_32 = arith.constant dense<0.000000e+00> : vector<16xf32>
    %64 = vector.multi_reduction <add>, %63, %cst_32 [1] : vector<16x128xf32> to vector<16xf32>
    %65 = vector.shape_cast %64 : vector<16xf32> to vector<16x1xf32>
    %cst_33 = arith.constant 3.125000e-02 : f32
    %66 = vector.broadcast %cst_33 : f32 to vector<16x1xf32>
    %67 = arith.mulf %65, %66 : vector<16x1xf32>
    %cst_34 = arith.constant 9.99999974E-6 : f32
    %68 = vector.broadcast %cst_34 : f32 to vector<16x1xf32>
    %69 = arith.addf %67, %68 : vector<16x1xf32>
    %70 = math.rsqrt %69 : vector<16x1xf32>
    %71 = vector.broadcast %70 : vector<16x1xf32> to vector<16x128xf32>
    %72 = arith.mulf %62, %71 : vector<16x128xf32>
    %73 = vector.broadcast %4 : vector<1x128xf32> to vector<16x128xf32>
    %74 = arith.mulf %72, %73 : vector<16x128xf32>
    %75 = vector.broadcast %5 : vector<1x128xf32> to vector<16x128xf32>
    %76 = arith.addf %74, %75 : vector<16x128xf32>
    %cst_35 = arith.constant 5.000000e-01 : f32
    %77 = vector.broadcast %cst_35 : f32 to vector<16x128xf32>
    %78 = arith.mulf %77, %76 : vector<16x128xf32>
    %cst_36 = arith.constant 1.41421354 : f32
    %79 = vector.broadcast %cst_36 : f32 to vector<16x128xf32>
    %80 = arith.divf %76, %79 : vector<16x128xf32>
    %81 = math.erf %80 : vector<16x128xf32>
    %cst_37 = arith.constant 1.000000e+00 : f32
    %82 = vector.broadcast %cst_37 : f32 to vector<16x128xf32>
    %83 = arith.addf %82, %81 : vector<16x128xf32>
    %84 = arith.mulf %78, %83 : vector<16x128xf32>
    %85 = arith.truncf %84 : vector<16x128xf32> to vector<16x128xbf16>
    %c0_38 = arith.constant 0 : index
    %c0_39 = arith.constant 0 : index
    %86 = vector.load %arg10[%c0_38, %c0_39] : memref<128x128xbf16, #tpu.memory_space<vmem>>, vector<128x128xbf16>
    %cst_40 = arith.constant dense<0.000000e+00> : vector<16x128xf32>
    %87 = tpu.matmul %85, %86, %cst_40 {dimension_numbers = #tpu.dot_dimension_numbers<[1], [0], [0], [1], [0, 0, 1, 1], [], []>} : vector<16x128xbf16>, vector<128x128xbf16>, vector<16x128xf32> -> vector<16x128xf32>
    %88 = vector.broadcast %6 : vector<1x128xf32> to vector<16x128xf32>
    %89 = arith.addf %87, %88 : vector<16x128xf32>
    %c0_41 = arith.constant 0 : index
    %c0_42 = arith.constant 0 : index
    %90 = vector.load %arg12[%c0_41, %c0_42] : memref<16x128xf32, #tpu.memory_space<vmem>>, vector<16x128xf32>
    tpu.vector_store %arg12[%c0_41, %c0_42], %89 {strides = array<i32>} : memref<16x128xf32, #tpu.memory_space<vmem>>, vector<16x128xf32>,
    return
  }
  func.func @transform_0(%arg0: i32) -> (i32, i32) {
    %c0_i32 = arith.constant 0 : i32
    %c0_i32_0 = arith.constant 0 : i32
    return %arg0, %c0_i32 : i32, i32
  }
  func.func @transform_1(%arg0: i32) -> (i32, i32) {
    %c0_i32 = arith.constant 0 : i32
    %c0_i32_0 = arith.constant 0 : i32
    %c0_i32_1 = arith.constant 0 : i32
    return %c0_i32, %c0_i32_0 : i32, i32
  }
  func.func @transform_2(%arg0: i32) -> (i32, i32) {
    %c0_i32 = arith.constant 0 : i32
    %c0_i32_0 = arith.constant 0 : i32
    %c0_i32_1 = arith.constant 0 : i32
    return %c0_i32, %c0_i32_0 : i32, i32
  }
  func.func @transform_3(%arg0: i32) -> (i32, i32) {
    %c0_i32 = arith.constant 0 : i32
    %c0_i32_0 = arith.constant 0 : i32
    %c0_i32_1 = arith.constant 0 : i32
    return %c0_i32, %c0_i32_0 : i32, i32
  }
  func.func @transform_4(%arg0: i32) -> (i32, i32) {
    %c0_i32 = arith.constant 0 : i32
    %c0_i32_0 = arith.constant 0 : i32
    %c0_i32_1 = arith.constant 0 : i32
    return %c0_i32, %c0_i32_0 : i32, i32
  }
  func.func @transform_5(%arg0: i32) -> (i32, i32) {
    %c0_i32 = arith.constant 0 : i32
    %c0_i32_0 = arith.constant 0 : i32
    %c0_i32_1 = arith.constant 0 : i32
    return %c0_i32, %c0_i32_0 : i32, i32
  }
  func.func @transform_6(%arg0: i32) -> (i32, i32) {
    %c0_i32 = arith.constant 0 : i32
    %c0_i32_0 = arith.constant 0 : i32
    %c0_i32_1 = arith.constant 0 : i32
    return %c0_i32, %c0_i32_0 : i32, i32
  }
  func.func @transform_7(%arg0: i32) -> (i32, i32) {
    %c0_i32 = arith.constant 0 : i32
    %c0_i32_0 = arith.constant 0 : i32
    %c0_i32_1 = arith.constant 0 : i32
    return %c0_i32, %c0_i32_0 : i32, i32
  }
  func.func @transform_8(%arg0: i32) -> (i32, i32) {
    %c0_i32 = arith.constant 0 : i32
    %c0_i32_0 = arith.constant 0 : i32
    %c0_i32_1 = arith.constant 0 : i32
    return %c0_i32, %c0_i32_0 : i32, i32
  }
  func.func @transform_9(%arg0: i32) -> (i32, i32) {
    %c0_i32 = arith.constant 0 : i32
    %c0_i32_0 = arith.constant 0 : i32
    %c0_i32_1 = arith.constant 0 : i32
    return %c0_i32, %c0_i32_0 : i32, i32
  }
  func.func @transform_10(%arg0: i32) -> (i32, i32) {
    %c0_i32 = arith.constant 0 : i32
    %c0_i32_0 = arith.constant 0 : i32
    %c0_i32_1 = arith.constant 0 : i32
    return %c0_i32, %c0_i32_0 : i32, i32
  }
  func.func @transform_11(%arg0: i32) -> (i32, i32) {
    %c0_i32 = arith.constant 0 : i32
    %c0_i32_0 = arith.constant 0 : i32
    return %arg0, %c0_i32 : i32, i32
  }
}

</mosaic_0001>

<llo_original>
// kernel: actor_forward.1
$region0: #{actor_forward.1}
  #allocation0 [shape = 'u32[]', space=smem, size = 0x4, offset = 0x4, fixed_abs, tag = 'smem constant byte address 0x4 - core index']
  #allocation1 [shape = 'u32[144,128]{1,0:T(1,128)}', space=vmem, size = 0x12000, scoped, tag = 'internal scratch']
  %s0 = inlined_call_operand.hbm [shape: f32[16,16], index: 0, kind: input, shape index: {}]
  %s1 = inlined_call_operand.vmem [shape: bf16[16,128], index: 1, kind: input, shape index: {}]
  %s2 = inlined_call_operand.vmem [shape: f32[1,128], index: 2, kind: input, shape index: {}]
  %s3 = inlined_call_operand.vmem [shape: f32[1,128], index: 3, kind: input, shape index: {}]
  %s4 = inlined_call_operand.vmem [shape: f32[1,128], index: 4, kind: input, shape index: {}]
  %s5 = inlined_call_operand.hbm [shape: bf16[128,128], index: 5, kind: input, shape index: {}]
  %s6 = inlined_call_operand.vmem [shape: f32[1,128], index: 6, kind: input, shape index: {}]
  %s7 = inlined_call_operand.vmem [shape: f32[1,128], index: 7, kind: input, shape index: {}]
  %s8 = inlined_call_operand.vmem [shape: f32[1,128], index: 8, kind: input, shape index: {}]
  %s9 = inlined_call_operand.hbm [shape: bf16[128,128], index: 9, kind: input, shape index: {}]
  %s10 = inlined_call_operand.vmem [shape: f32[1,128], index: 10, kind: input, shape index: {}]
  %s11 = inlined_call_operand.vmem [shape: f32[16,128], index: 11, kind: output, shape index: {}]
  %s12 = sld [smem:[#allocation0]]
  $region66: #{actor_forward.1} parent=0
    _
  %s14 = ssub.s32 1, %s12
  %s15 = scalar_select 0, %s14, %s12
  $region1: #{actor_forward.1} parent=0
    #allocation2 [shape = 'u8[8192]{0}', space=vmem, size = 0x2000, scoped, tag = 'input window, operand 0, single buffered']
    #allocation3 [shape = 's32[1]{0}', space=sflag, size = 0x4, scoped, tag = 'scoped memory for actor_forward.1']
    #allocation4 [shape = 'u8[32768]{0}', space=vmem, size = 0x8000, scoped, tag = 'input window, operand 5, single buffered']
    #allocation5 [shape = 's32[1]{0}', space=sflag, size = 0x4, scoped, tag = 'scoped memory for actor_forward.1']
    #allocation6 [shape = 'u8[32768]{0}', space=vmem, size = 0x8000, scoped, tag = 'input window, operand 9, single buffered']
    %16 = vsyncpa [#allocation3], 0
    %17 = vsyncpa [#allocation5], 0
    // Predicated region
    $region2: #{actor_forward.1} parent=1 // pred_check
      _
    $region3: #{actor_forward.1} parent=1 // pred_check_branch
      %19 = sbr.rel (0) target = $region5
    $region4: #{actor_forward.1} parent=1 // pred_region
      %s21 = ssub.s32 256, 256
      %22 = vsyncadd [#allocation3], %s21
      %s23 = sshll.u32 [#allocation2], 4
      %s24 = int_to_ptr.vmem [resolvable:$true] %s23
      %29 = dma.hbm_to_vmem [thread:$0]  %s0, 256, %s24, [#allocation3], 128, 128, 8
    $region5: #{actor_forward.1} parent=1 // pred_fallthru
      _
    // Predicated region
    $region6: #{actor_forward.1} parent=1 // pred_check
      _
    $region7: #{actor_forward.1} parent=1 // pred_check_branch
      %31 = sbr.rel (0) target = $region9
    $region8: #{actor_forward.1} parent=1 // pred_region
      _
    $region9: #{actor_forward.1} parent=1 // pred_fallthru
      _
    // Predicated region
    $region10: #{actor_forward.1} parent=1 // pred_check
      _
    $region11: #{actor_forward.1} parent=1 // pred_check_branch
      %33 = sbr.rel (0) target = $region13
    $region12: #{actor_forward.1} parent=1 // pred_region
      _
    $region13: #{actor_forward.1} parent=1 // pred_fallthru
      _
    // Predicated region
    $region14: #{actor_forward.1} parent=1 // pred_check
      _
    $region15: #{actor_forward.1} parent=1 // pred_check_branch
      %35 = sbr.rel (0) target = $region17
    $region16: #{actor_forward.1} parent=1 // pred_region
      _
    $region17: #{actor_forward.1} parent=1 // pred_fallthru
      _
    // Predicated region
    $region18: #{actor_forward.1} parent=1 // pred_check
      _
    $region19: #{actor_forward.1} parent=1 // pred_check_branch
      %37 = sbr.rel (0) target = $region21
    $region20: #{actor_forward.1} parent=1 // pred_region
      _
    $region21: #{actor_forward.1} parent=1 // pred_fallthru
      _
    // Predicated region
    $region22: #{actor_forward.1} parent=1 // pred_check
      _
    $region23: #{actor_forward.1} parent=1 // pred_check_branch
      %39 = sbr.rel (0) target = $region25
    $region24: #{actor_forward.1} parent=1 // pred_region
      %s41 = ssub.s32 1024, 1024
      %42 = vsyncadd [#allocation5], %s41
      %s43 = sshll.u32 [#allocation4], 4
      %s44 = int_to_ptr.vmem [resolvable:$true] %s43
      %49 = dma.hbm_to_vmem [thread:$0]  %s5, 1024, %s44, [#allocation5], 64, 64, 4
    $region25: #{actor_forward.1} parent=1 // pred_fallthru
      _
    // Predicated region
    $region26: #{actor_forward.1} parent=1 // pred_check
      _
    $region27: #{actor_forward.1} parent=1 // pred_check_branch
      %51 = sbr.rel (0) target = $region29
    $region28: #{actor_forward.1} parent=1 // pred_region
      _
    $region29: #{actor_forward.1} parent=1 // pred_fallthru
      _
    // Predicated region
    $region30: #{actor_forward.1} parent=1 // pred_check
      _
    $region31: #{actor_forward.1} parent=1 // pred_check_branch
      %53 = sbr.rel (0) target = $region33
    $region32: #{actor_forward.1} parent=1 // pred_region
      _
    $region33: #{actor_forward.1} parent=1 // pred_fallthru
      _
    // Predicated region
    $region34: #{actor_forward.1} parent=1 // pred_check
      _
    $region35: #{actor_forward.1} parent=1 // pred_check_branch
      %55 = sbr.rel (0) target = $region37
    $region36: #{actor_forward.1} parent=1 // pred_region
      _
    $region37: #{actor_forward.1} parent=1 // pred_fallthru
      _
    // Predicated region
    $region38: #{actor_forward.1} parent=1 // pred_check
      _
    $region39: #{actor_forward.1} parent=1 // pred_check_branch
      %57 = sbr.rel (0) target = $region41
    $region40: #{actor_forward.1} parent=1 // pred_region
      %s59 = ssub.s32 1024, 1024
      %60 = vsyncadd [#allocation5], %s59
      %s61 = sshll.u32 [#allocation6], 4
      %s62 = int_to_ptr.vmem [resolvable:$true] %s61
      %67 = dma.hbm_to_vmem [thread:$0]  %s9, 1024, %s62, [#allocation5], 64, 64, 4
    $region41: #{actor_forward.1} parent=1 // pred_fallthru
      _
    // Predicated region
    $region42: #{actor_forward.1} parent=1 // pred_check
      _
    $region43: #{actor_forward.1} parent=1 // pred_check_branch
      %69 = sbr.rel (0) target = $region45
    $region44: #{actor_forward.1} parent=1 // pred_region
      _
    $region45: #{actor_forward.1} parent=1 // pred_fallthru
      _
    // Predicated region
    $region46: #{actor_forward.1} parent=1 // pred_check
      _
    $region47: #{actor_forward.1} parent=1 // pred_check_branch
      %71 = sbr.rel (0) target = $region49
    $region48: #{actor_forward.1} parent=1 // pred_region
      %72 = dma.done [#allocation3], 256
    $region49: #{actor_forward.1} parent=1 // pred_fallthru
      _
    // Predicated region
    $region50: #{actor_forward.1} parent=1 // pred_check
      _
    $region51: #{actor_forward.1} parent=1 // pred_check_branch
      %74 = sbr.rel (0) target = $region53
    $region52: #{actor_forward.1} parent=1 // pred_region
      %75 = dma.done [#allocation5], 1024
    $region53: #{actor_forward.1} parent=1 // pred_fallthru
      _
    // Predicated region
    $region54: #{actor_forward.1} parent=1 // pred_check
      _
    $region55: #{actor_forward.1} parent=1 // pred_check_branch
      %77 = sbr.rel (0) target = $region57
    $region56: #{actor_forward.1} parent=1 // pred_region
      %78 = dma.done [#allocation5], 1024
    $region57: #{actor_forward.1} parent=1 // pred_fallthru
      _
    %v80 = vld [vmem:[%s2] sm:$0x1]
    %v81 = vld [vmem:[%s3] sm:$0x1]
    %v82 = vld [vmem:[%s4] sm:$0x1]
    %v83 = vld [vmem:[%s6] sm:$0x1]
    %v84 = vld [vmem:[%s7] sm:$0x1]
    %v85 = vld [vmem:[%s8] sm:$0x1]
    %v86 = vld [vmem:[%s10] sm:$0x1]
    %v87 = vlaneseq
    %v88 = vand.u32 %v87, 127
    %vm89 = vcmp.lt.s32.totalorder %v88, 32
    %v90 = vld [vmem:[#allocation2] sm:$0xff]
    %v91 = vld [vmem:[#allocation2 + $0x8] sm:$0xff]
    %v92 = vpack.c.bf16 %v91, %v90
    %v93 = vld [vmem:[%s1] sm:$0xf]
    %v94 = vld [vmem:[%s1 + $0x4] sm:$0xf]
    %v96 = vlaneseq
    %v97 = vshrl.u32 %v96, 7
    %v98 = vsub.s32 0, %v97
    %v99 = vrot.slane %v80, %v98
    %v103 = vunpack.c.l.b16 %v93
    %v104 = vunpack.c.l.b16 %v94
    %v105 = vpack.c.b16 %v104, %v103
    %vm107 = vcmask 130048
    %v109 = vsel %vm107, %v92, 0
    %111 = vmatprep.subr.bf16.mxu0 0
    %112 = vmatpush1.bf16.msra.mxu0 %v105
    %113 = vmatprep.subr.bf16.mxu0 0
    %114 = vmatpush1.bf16.msra.mxu0 0
    %115 = vmatprep.subr.bf16.mxu0 0
    %116 = vmatpush1.bf16.msra.mxu0 0
    %117 = vmatprep.subr.bf16.mxu0 0
    %118 = vmatpush1.bf16.msra.mxu0 0
    %119 = vmatprep.subr.bf16.mxu0 0
    %120 = vmatpush1.bf16.msra.mxu0 0
    %121 = vmatprep.subr.bf16.mxu0 0
    %122 = vmatpush1.bf16.msra.mxu0 0
    %123 = vmatprep.subr.bf16.mxu0 0
    %124 = vmatpush1.bf16.msra.mxu0 0
    %125 = vmatprep.subr.bf16.mxu0 0
    %126 = vmatpush1.bf16.msra.mxu0 0
    %127 = vmatprep.subr.bf16.mxu0 0
    %128 = vmatpush1.bf16.msra.mxu0 0
    %129 = vmatprep.subr.bf16.mxu0 0
    %130 = vmatpush1.bf16.msra.mxu0 0
    %131 = vmatprep.subr.bf16.mxu0 0
    %132 = vmatpush1.bf16.msra.mxu0 0
    %133 = vmatprep.subr.bf16.mxu0 0
    %134 = vmatpush1.bf16.msra.mxu0 0
    %135 = vmatprep.subr.bf16.mxu0 0
    %136 = vmatpush1.bf16.msra.mxu0 0
    %137 = vmatprep.subr.bf16.mxu0 0
    %138 = vmatpush1.bf16.msra.mxu0 0
    %139 = vmatprep.subr.bf16.mxu0 0
    %140 = vmatpush1.bf16.msra.mxu0 0
    %141 = vmatprep.subr.bf16.mxu0 0
    %142 = vmatpush1.bf16.msra.mxu0 0
    %143 = vmatprep.mubr.bf16.mxu0 0
    %144 = vmatmul.mubr.bf16.gmra.mrb[0].mxu0 %v109
    %v145 = vpop.f32.mrb[0].mxu0
    %v146 = vadd.f32 %v99, %v145
    %v147 = vpop.f32.mrb[0].mxu0
    %v148 = vpop.f32.mrb[0].mxu0
    %v149 = vadd.f32 %v99, %v148
    %v150 = vpop.f32.mrb[0].mxu0
    %151 = vdwg.mxu0
    %152 = vadd.xlane.f32.xlu0 %v146
    %v153 = vpop.xlane.xlu0 %152
    %154 = vadd.xlane.f32.xlu0 %v149
    %v155 = vpop.xlane.xlu0 %154
    %v156 = vmul.f32 %v153, 0.03125
    %v157 = vmul.f32 %v155, 0.03125
    %v158 = vsub.f32 %v146, %v156
    %v159 = vsub.f32 %v149, %v157
    %v160 = vsel %vm89, 1, 0
    %vm161 = vcmp.eq.s32.totalorder %v160, 1
    %v162 = vsel %vm161, %v158, 0.0
    %v163 = vsel %vm161, %v159, 0.0
    %v164 = vmul.f32 %v162, %v162
    %v165 = vmul.f32 %v163, %v163
    %166 = vadd.xlane.f32.xlu0 %v164
    %v167 = vpop.xlane.xlu0 %166
    %168 = vadd.xlane.f32.xlu0 %v165
    %v169 = vpop.xlane.xlu0 %168
    %v170 = vmul.f32 %v167, 0.03125
    %v171 = vmul.f32 %v169, 0.03125
    %v172 = vadd.f32 %v170, 1e-05
    %v173 = vadd.f32 %v171, 1e-05
    %v174 = vrsqrt.pop %v172
    %v175 = vrsqrt.pop %v173
    %v176 = vmul.f32 %v162, %v174
    %v177 = vmul.f32 %v163, %v175
    %v179 = vlaneseq
    %v180 = vshrl.u32 %v179, 7
    %v181 = vsub.s32 0, %v180
    %v182 = vrot.slane %v81, %v181
    %v184 = vmul.f32 %v176, %v182
    %v185 = vmul.f32 %v177, %v182
    %v187 = vlaneseq
    %v188 = vshrl.u32 %v187, 7
    %v189 = vsub.s32 0, %v188
    %v190 = vrot.slane %v82, %v189
    %v192 = vadd.f32 %v184, %v190
    %v193 = vadd.f32 %v185, %v190
    %v194 = vmul.f32 %v192, 0.5
    %v195 = vmul.f32 %v193, 0.5
    %v196 = vrcp.pop 1.4142135
    %v197 = vmul.f32 %v192, %v196
    %v198 = vmul.f32 %v193, %v196
    %v199 = verf.f32.pop %v197
    %v200 = verf.f32.pop %v198
    %v201 = vadd.f32 %v199, 1.0
    %v202 = vadd.f32 %v200, 1.0
    %v203 = vmul.f32 %v194, %v201
    %v204 = vmul.f32 %v195, %v202
    %v205 = vpack.c.bf16 %v204, %v203
    %v206 = vld [vmem:[#allocation4] sm:$0xf]
    %v207 = vld [vmem:[#allocation4 + $0x4] sm:$0xf]
    %v208 = vld [vmem:[#allocation4 + $0x8] sm:$0xf]
    %v209 = vld [vmem:[#allocation4 + $0xc] sm:$0xf]
    %v210 = vld [vmem:[#allocation4 + $0x10] sm:$0xf]
    %v211 = vld [vmem:[#allocation4 + $0x14] sm:$0xf]
    %v212 = vld [vmem:[#allocation4 + $0x18] sm:$0xf]
    %v213 = vld [vmem:[#allocation4 + $0x1c] sm:$0xf]
    %v214 = vld [vmem:[#allocation4 + $0x20] sm:$0xf]
    %v215 = vld [vmem:[#allocation4 + $0x24] sm:$0xf]
    %v216 = vld [vmem:[#allocation4 + $0x28] sm:$0xf]
    %v217 = vld [vmem:[#allocation4 + $0x2c] sm:$0xf]
    %v218 = vld [vmem:[#allocation4 + $0x30] sm:$0xf]
    %v219 = vld [vmem:[#allocation4 + $0x34] sm:$0xf]
    %v220 = vld [vmem:[#allocation4 + $0x38] sm:$0xf]
    %v221 = vld [vmem:[#allocation4 + $0x3c] sm:$0xf]
    %v223 = vlaneseq
    %v224 = vshrl.u32 %v223, 7
    %v225 = vsub.s32 0, %v224
    %v226 = vrot.slane %v83, %v225
    %v244 = vunpack.c.l.b16 %v206
    %v245 = vunpack.c.l.b16 %v207
    %v246 = vunpack.c.l.b16 %v208
    %v247 = vunpack.c.l.b16 %v209
    %v248 = vunpack.c.l.b16 %v210
    %v249 = vunpack.c.l.b16 %v211
    %v250 = vunpack.c.l.b16 %v212
    %v251 = vunpack.c.l.b16 %v213
    %v252 = vunpack.c.l.b16 %v214
    %v253 = vunpack.c.l.b16 %v215
    %v254 = vunpack.c.l.b16 %v216
    %v255 = vunpack.c.l.b16 %v217
    %v256 = vunpack.c.l.b16 %v218
    %v257 = vunpack.c.l.b16 %v219
    %v258 = vunpack.c.l.b16 %v220
    %v259 = vunpack.c.l.b16 %v221
    %v260 = vpack.c.b16 %v245, %v244
    %v261 = vpack.c.b16 %v247, %v246
    %v262 = vpack.c.b16 %v249, %v248
    %v263 = vpack.c.b16 %v251, %v250
    %v264 = vpack.c.b16 %v253, %v252
    %v265 = vpack.c.b16 %v255, %v254
    %v266 = vpack.c.b16 %v257, %v256
    %v267 = vpack.c.b16 %v259, %v258
    %276 = vmatprep.subr.bf16.mxu0 0
    %277 = vmatpush1.bf16.msra.mxu0 %v260
    %278 = vmatprep.subr.bf16.mxu0 0
    %279 = vmatpush1.bf16.msra.mxu0 %v261
    %280 = vmatprep.subr.bf16.mxu0 0
    %281 = vmatpush1.bf16.msra.mxu0 %v262
    %282 = vmatprep.subr.bf16.mxu0 0
    %283 = vmatpush1.bf16.msra.mxu0 %v263
    %284 = vmatprep.subr.bf16.mxu0 0
    %285 = vmatpush1.bf16.msra.mxu0 %v264
    %286 = vmatprep.subr.bf16.mxu0 0
    %287 = vmatpush1.bf16.msra.mxu0 %v265
    %288 = vmatprep.subr.bf16.mxu0 0
    %289 = vmatpush1.bf16.msra.mxu0 %v266
    %290 = vmatprep.subr.bf16.mxu0 0
    %291 = vmatpush1.bf16.msra.mxu0 %v267
    %292 = vmatprep.subr.bf16.mxu0 0
    %293 = vmatpush1.bf16.msra.mxu0 0
    %294 = vmatprep.subr.bf16.mxu0 0
    %295 = vmatpush1.bf16.msra.mxu0 0
    %296 = vmatprep.subr.bf16.mxu0 0
    %297 = vmatpush1.bf16.msra.mxu0 0
    %298 = vmatprep.subr.bf16.mxu0 0
    %299 = vmatpush1.bf16.msra.mxu0 0
    %300 = vmatprep.subr.bf16.mxu0 0
    %301 = vmatpush1.bf16.msra.mxu0 0
    %302 = vmatprep.subr.bf16.mxu0 0
    %303 = vmatpush1.bf16.msra.mxu0 0
    %304 = vmatprep.subr.bf16.mxu0 0
    %305 = vmatpush1.bf16.msra.mxu0 0
    %306 = vmatprep.subr.bf16.mxu0 0
    %307 = vmatpush1.bf16.msra.mxu0 0
    %308 = vmatprep.mubr.bf16.mxu0 0
    %309 = vmatmul.mubr.bf16.gmra.mrb[0].mxu0 %v205
    %v310 = vpop.f32.mrb[0].mxu0
    %v311 = vadd.f32 %v226, %v310
    %v312 = vpop.f32.mrb[0].mxu0
    %v313 = vpop.f32.mrb[0].mxu0
    %v314 = vadd.f32 %v226, %v313
    %v315 = vpop.f32.mrb[0].mxu0
    %316 = vdwg.mxu0
    %317 = vadd.xlane.f32.xlu0 %v311
    %v318 = vpop.xlane.xlu0 %317
    %319 = vadd.xlane.f32.xlu0 %v314
    %v320 = vpop.xlane.xlu0 %319
    %v321 = vmul.f32 %v318, 0.03125
    %v322 = vmul.f32 %v320, 0.03125
    %v323 = vsub.f32 %v311, %v321
    %v324 = vsub.f32 %v314, %v322
    %v325 = vsel %vm161, %v323, 0.0
    %v326 = vsel %vm161, %v324, 0.0
    %v327 = vmul.f32 %v325, %v325
    %v328 = vmul.f32 %v326, %v326
    %329 = vadd.xlane.f32.xlu0 %v327
    %v330 = vpop.xlane.xlu0 %329
    %331 = vadd.xlane.f32.xlu0 %v328
    %v332 = vpop.xlane.xlu0 %331
    %v333 = vmul.f32 %v330, 0.03125
    %v334 = vmul.f32 %v332, 0.03125
    %v335 = vadd.f32 %v333, 1e-05
    %v336 = vadd.f32 %v334, 1e-05
    %v337 = vrsqrt.pop %v335
    %v338 = vrsqrt.pop %v336
    %v339 = vmul.f32 %v325, %v337
    %v340 = vmul.f32 %v326, %v338
    %v342 = vlaneseq
    %v343 = vshrl.u32 %v342, 7
    %v344 = vsub.s32 0, %v343
    %v345 = vrot.slane %v84, %v344
    %v347 = vmul.f32 %v339, %v345
    %v348 = vmul.f32 %v340, %v345
    %v350 = vlaneseq
    %v351 = vshrl.u32 %v350, 7
    %v352 = vsub.s32 0, %v351
    %v353 = vrot.slane %v85, %v352
    %v355 = vadd.f32 %v347, %v353
    %v356 = vadd.f32 %v348, %v353
    %v357 = vmul.f32 %v355, 0.5
    %v358 = vmul.f32 %v356, 0.5
    %v359 = vmul.f32 %v355, %v196
    %v360 = vmul.f32 %v356, %v196
    %v361 = verf.f32.pop %v359
    %v362 = verf.f32.pop %v360
    %v363 = vadd.f32 %v361, 1.0
    %v364 = vadd.f32 %v362, 1.0
    %v365 = vmul.f32 %v357, %v363
    %v366 = vmul.f32 %v358, %v364
    %v367 = vpack.c.bf16 %v366, %v365
    %v368 = vld [vmem:[#allocation6] sm:$0xf]
    %v369 = vld [vmem:[#allocation6 + $0x4] sm:$0xf]
    %v370 = vld [vmem:[#allocation6 + $0x8] sm:$0xf]
    %v371 = vld [vmem:[#allocation6 + $0xc] sm:$0xf]
    %v372 = vld [vmem:[#allocation6 + $0x10] sm:$0xf]
    %v373 = vld [vmem:[#allocation6 + $0x14] sm:$0xf]
    %v374 = vld [vmem:[#allocation6 + $0x18] sm:$0xf]
    %v375 = vld [vmem:[#allocation6 + $0x1c] sm:$0xf]
    %v376 = vld [vmem:[#allocation6 + $0x20] sm:$0xf]
    %v377 = vld [vmem:[#allocation6 + $0x24] sm:$0xf]
    %v378 = vld [vmem:[#allocation6 + $0x28] sm:$0xf]
    %v379 = vld [vmem:[#allocation6 + $0x2c] sm:$0xf]
    %v380 = vld [vmem:[#allocation6 + $0x30] sm:$0xf]
    %v381 = vld [vmem:[#allocation6 + $0x34] sm:$0xf]
    %v382 = vld [vmem:[#allocation6 + $0x38] sm:$0xf]
    %v383 = vld [vmem:[#allocation6 + $0x3c] sm:$0xf]
    %v385 = vlaneseq
    %v386 = vshrl.u32 %v385, 7
    %v387 = vsub.s32 0, %v386
    %v388 = vrot.slane %v86, %v387
    %v406 = vunpack.c.l.b16 %v368
    %v407 = vunpack.c.l.b16 %v369
    %v408 = vunpack.c.l.b16 %v370
    %v409 = vunpack.c.l.b16 %v371
    %v410 = vunpack.c.l.b16 %v372
    %v411 = vunpack.c.l.b16 %v373
    %v412 = vunpack.c.l.b16 %v374
    %v413 = vunpack.c.l.b16 %v375
    %v414 = vunpack.c.l.b16 %v376
    %v415 = vunpack.c.l.b16 %v377
    %v416 = vunpack.c.l.b16 %v378
    %v417 = vunpack.c.l.b16 %v379
    %v418 = vunpack.c.l.b16 %v380
    %v419 = vunpack.c.l.b16 %v381
    %v420 = vunpack.c.l.b16 %v382
    %v421 = vunpack.c.l.b16 %v383
    %v422 = vpack.c.b16 %v407, %v406
    %v423 = vpack.c.b16 %v409, %v408
    %v424 = vpack.c.b16 %v411, %v410
    %v425 = vpack.c.b16 %v413, %v412
    %v426 = vpack.c.b16 %v415, %v414
    %v427 = vpack.c.b16 %v417, %v416
    %v428 = vpack.c.b16 %v419, %v418
    %v429 = vpack.c.b16 %v421, %v420
    %438 = vmatprep.subr.bf16.mxu0 0
    %439 = vmatpush1.bf16.msra.mxu0 %v422
    %440 = vmatprep.subr.bf16.mxu0 0
    %441 = vmatpush1.bf16.msra.mxu0 %v423
    %442 = vmatprep.subr.bf16.mxu0 0
    %443 = vmatpush1.bf16.msra.mxu0 %v424
    %444 = vmatprep.subr.bf16.mxu0 0
    %445 = vmatpush1.bf16.msra.mxu0 %v425
    %446 = vmatprep.subr.bf16.mxu0 0
    %447 = vmatpush1.bf16.msra.mxu0 %v426
    %448 = vmatprep.subr.bf16.mxu0 0
    %449 = vmatpush1.bf16.msra.mxu0 %v427
    %450 = vmatprep.subr.bf16.mxu0 0
    %451 = vmatpush1.bf16.msra.mxu0 %v428
    %452 = vmatprep.subr.bf16.mxu0 0
    %453 = vmatpush1.bf16.msra.mxu0 %v429
    %454 = vmatprep.subr.bf16.mxu0 0
    %455 = vmatpush1.bf16.msra.mxu0 0
    %456 = vmatprep.subr.bf16.mxu0 0
    %457 = vmatpush1.bf16.msra.mxu0 0
    %458 = vmatprep.subr.bf16.mxu0 0
    %459 = vmatpush1.bf16.msra.mxu0 0
    %460 = vmatprep.subr.bf16.mxu0 0
    %461 = vmatpush1.bf16.msra.mxu0 0
    %462 = vmatprep.subr.bf16.mxu0 0
    %463 = vmatpush1.bf16.msra.mxu0 0
    %464 = vmatprep.subr.bf16.mxu0 0
    %465 = vmatpush1.bf16.msra.mxu0 0
    %466 = vmatprep.subr.bf16.mxu0 0
    %467 = vmatpush1.bf16.msra.mxu0 0
    %468 = vmatprep.subr.bf16.mxu0 0
    %469 = vmatpush1.bf16.msra.mxu0 0
    %470 = vmatprep.mubr.bf16.mxu0 0
    %471 = vmatmul.mubr.bf16.gmra.mrb[0].mxu0 %v367
    %v472 = vpop.f32.mrb[0].mxu0
    %v473 = vadd.f32 %v388, %v472
    %v474 = vpop.f32.mrb[0].mxu0
    %v475 = vpop.f32.mrb[0].mxu0
    %v476 = vadd.f32 %v388, %v475
    %v477 = vpop.f32.mrb[0].mxu0
    %478 = vdwg.mxu0
    %479 = vst [vmem:[%s11] sm:$0xff] %v473
    %480 = vst [vmem:[%s11 + $0x8] sm:$0xff] %v476
    // Predicated region
    $region58: #{actor_forward.1} parent=1 // pred_check
      _
    $region59: #{actor_forward.1} parent=1 // pred_check_branch
      %482 = sbr.rel (0) target = $region61
    $region60: #{actor_forward.1} parent=1 // pred_region
      _
    $region61: #{actor_forward.1} parent=1 // pred_fallthru
      _
    // Predicated region
    $region62: #{actor_forward.1} parent=1 // pred_check
      _
    $region63: #{actor_forward.1} parent=1 // pred_check_branch
      %484 = sbr.rel (0) target = $region65
    $region64: #{actor_forward.1} parent=1 // pred_region
      _
    $region65: #{actor_forward.1} parent=1 // pred_fallthru
      _
    %485 = vsyncpa [#allocation3], 1
    %486 = vsyncpa [#allocation5], 1

// kernel: actor_forward.1
$region0: #{actor_forward.1}
  #allocation0 [shape = 'u32[]', space=smem, size = 0x4, offset = 0x4, fixed_abs, tag = 'smem constant byte address 0x4 - core index']
  #allocation1 [shape = 'u32[144,128]{1,0:T(1,128)}', space=vmem, size = 0x12000, scoped, tag = 'internal scratch']
  %s0 = inlined_call_operand.hbm [shape: f32[16,16], index: 0, kind: input, shape index: {}]
  %s1 = inlined_call_operand.vmem [shape: bf16[16,128], index: 1, kind: input, shape index: {}]
  %s2 = inlined_call_operand.vmem [shape: f32[1,128], index: 2, kind: input, shape index: {}]
  %s3 = inlined_call_operand.vmem [shape: f32[1,128], index: 3, kind: input, shape index: {}]
  %s4 = inlined_call_operand.vmem [shape: f32[1,128], index: 4, kind: input, shape index: {}]
  %s5 = inlined_call_operand.hbm [shape: bf16[128,128], index: 5, kind: input, shape index: {}]
  %s6 = inlined_call_operand.vmem [shape: f32[1,128], index: 6, kind: input, shape index: {}]
  %s7 = inlined_call_operand.vmem [shape: f32[1,128], index: 7, kind: input, shape index: {}]
  %s8 = inlined_call_operand.vmem [shape: f32[1,128], index: 8, kind: input, shape index: {}]
  %s9 = inlined_call_operand.hbm [shape: bf16[128,128], index: 9, kind: input, shape index: {}]
  %s10 = inlined_call_operand.vmem [shape: f32[1,128], index: 10, kind: input, shape index: {}]
  %s11 = inlined_call_operand.vmem [shape: f32[16,128], index: 11, kind: output, shape index: {}]
  %s12 = sld [smem:[#allocation0]]
  $region66: #{actor_forward.1} parent=0
    _
  %s14 = ssub.s32 1, %s12
  %s15 = scalar_select 0, %s14, %s12
  $region1: #{actor_forward.1} parent=0
    #allocation2 [shape = 'u8[8192]{0}', space=vmem, size = 0x2000, scoped, tag = 'input window, operand 0, single buffered']
    #allocation3 [shape = 's32[1]{0}', space=sflag, size = 0x4, scoped, tag = 'scoped memory for actor_forward.1']
    #allocation4 [shape = 'u8[32768]{0}', space=vmem, size = 0x8000, scoped, tag = 'input window, operand 5, single buffered']
    #allocation5 [shape = 's32[1]{0}', space=sflag, size = 0x4, scoped, tag = 'scoped memory for actor_forward.1']
    #allocation6 [shape = 'u8[32768]{0}', space=vmem, size = 0x8000, scoped, tag = 'input window, operand 9, single buffered']
    %16 = vsyncpa [#allocation3], 0
    %17 = vsyncpa [#allocation5], 0
    // Predicated region
    $region2: #{actor_forward.1} parent=1 // pred_check
      _
    $region3: #{actor_forward.1} parent=1 // pred_check_branch
      %19 = sbr.rel (0) target = $region5
    $region4: #{actor_forward.1} parent=1 // pred_region
      %s21 = ssub.s32 256, 256
      %22 = vsyncadd [#allocation3], %s21
      %s23 = sshll.u32 [#allocation2], 4
      %s24 = int_to_ptr.vmem [resolvable:$true] %s23
      %29 = dma.hbm_to_vmem [thread:$0]  %s0, 256, %s24, [#allocation3], 128, 128, 8
    $region5: #{actor_forward.1} parent=1 // pred_fallthru
      _
    // Predicated region
    $region6: #{actor_forward.1} parent=1 // pred_check
      _
    $region7: #{actor_forward.1} parent=1 // pred_check_branch
      %31 = sbr.rel (0) target = $region9
    $region8: #{actor_forward.1} parent=1 // pred_region
      _
    $region9: #{actor_forward.1} parent=1 // pred_fallthru
      _
    // Predicated region
    $region10: #{actor_forward.1} parent=1 // pred_check
      _
    $region11: #{actor_forward.1} parent=1 // pred_check_branch
      %33 = sbr.rel (0) target = $region13
    $region12: #{actor_forward.1} parent=1 // pred_region
      _
    $region13: #{actor_forward.1} parent=1 // pred_fallthru
      _
    // Predicated region
    $region14: #{actor_forward.1} parent=1 // pred_check
      _
    $region15: #{actor_forward.1} parent=1 // pred_check_branch
      %35 = sbr.rel (0) target = $region17
    $region16: #{actor_forward.1} parent=1 // pred_region
      _
    $region17: #{actor_forward.1} parent=1 // pred_fallthru
      _
    // Predicated region
    $region18: #{actor_forward.1} parent=1 // pred_check
      _
    $region19: #{actor_forward.1} parent=1 // pred_check_branch
      %37 = sbr.rel (0) target = $region21
    $region20: #{actor_forward.1} parent=1 // pred_region
      _
    $region21: #{actor_forward.1} parent=1 // pred_fallthru
      _
    // Predicated region
    $region22: #{actor_forward.1} parent=1 // pred_check
      _
    $region23: #{actor_forward.1} parent=1 // pred_check_branch
      %39 = sbr.rel (0) target = $region25
    $region24: #{actor_forward.1} parent=1 // pred_region
      %s41 = ssub.s32 1024, 1024
      %42 = vsyncadd [#allocation5], %s41
      %s43 = sshll.u32 [#allocation4], 4
      %s44 = int_to_ptr.vmem [resolvable:$true] %s43
      %49 = dma.hbm_to_vmem [thread:$0]  %s5, 1024, %s44, [#allocation5], 64, 64, 4
    $region25: #{actor_forward.1} parent=1 // pred_fallthru
      _
    // Predicated region
    $region26: #{actor_forward.1} parent=1 // pred_check
      _
    $region27: #{actor_forward.1} parent=1 // pred_check_branch
      %51 = sbr.rel (0) target = $region29
    $region28: #{actor_forward.1} parent=1 // pred_region
      _
    $region29: #{actor_forward.1} parent=1 // pred_fallthru
      _
    // Predicated region
    $region30: #{actor_forward.1} parent=1 // pred_check
      _
    $region31: #{actor_forward.1} parent=1 // pred_check_branch
      %53 = sbr.rel (0) target = $region33
    $region32: #{actor_forward.1} parent=1 // pred_region
      _
    $region33: #{actor_forward.1} parent=1 // pred_fallthru
      _
    // Predicated region
    $region34: #{actor_forward.1} parent=1 // pred_check
      _
    $region35: #{actor_forward.1} parent=1 // pred_check_branch
      %55 = sbr.rel (0) target = $region37
    $region36: #{actor_forward.1} parent=1 // pred_region
      _
    $region37: #{actor_forward.1} parent=1 // pred_fallthru
      _
    // Predicated region
    $region38: #{actor_forward.1} parent=1 // pred_check
      _
    $region39: #{actor_forward.1} parent=1 // pred_check_branch
      %57 = sbr.rel (0) target = $region41
    $region40: #{actor_forward.1} parent=1 // pred_region
      %s59 = ssub.s32 1024, 1024
      %60 = vsyncadd [#allocation5], %s59
      %s61 = sshll.u32 [#allocation6], 4
      %s62 = int_to_ptr.vmem [resolvable:$true] %s61
      %67 = dma.hbm_to_vmem [thread:$0]  %s9, 1024, %s62, [#allocation5], 64, 64, 4
    $region41: #{actor_forward.1} parent=1 // pred_fallthru
      _
    // Predicated region
    $region42: #{actor_forward.1} parent=1 // pred_check
      _
    $region43: #{actor_forward.1} parent=1 // pred_check_branch
      %69 = sbr.rel (0) target = $region45
    $region44: #{actor_forward.1} parent=1 // pred_region
      _
    $region45: #{actor_forward.1} parent=1 // pred_fallthru
      _
    // Predicated region
    $region46: #{actor_forward.1} parent=1 // pred_check
      _
    $region47: #{actor_forward.1} parent=1 // pred_check_branch
      %71 = sbr.rel (0) target = $region49
    $region48: #{actor_forward.1} parent=1 // pred_region
      %72 = dma.done [#allocation3], 256
    $region49: #{actor_forward.1} parent=1 // pred_fallthru
      _
    // Predicated region
    $region50: #{actor_forward.1} parent=1 // pred_check
      _
    $region51: #{actor_forward.1} parent=1 // pred_check_branch
      %74 = sbr.rel (0) target = $region53
    $region52: #{actor_forward.1} parent=1 // pred_region
      %75 = dma.done [#allocation5], 1024
    $region53: #{actor_forward.1} parent=1 // pred_fallthru
      _
    // Predicated region
    $region54: #{actor_forward.1} parent=1 // pred_check
      _
    $region55: #{actor_forward.1} parent=1 // pred_check_branch
      %77 = sbr.rel (0) target = $region57
    $region56: #{actor_forward.1} parent=1 // pred_region
      %78 = dma.done [#allocation5], 1024
    $region57: #{actor_forward.1} parent=1 // pred_fallthru
      _
    %v80 = vld [vmem:[%s2] sm:$0x1]
    %v81 = vld [vmem:[%s3] sm:$0x1]
    %v82 = vld [vmem:[%s4] sm:$0x1]
    %v83 = vld [vmem:[%s6] sm:$0x1]
    %v84 = vld [vmem:[%s7] sm:$0x1]
    %v85 = vld [vmem:[%s8] sm:$0x1]
    %v86 = vld [vmem:[%s10] sm:$0x1]
    %v87 = vlaneseq
    %v88 = vand.u32 %v87, 127
    %vm89 = vcmp.lt.s32.totalorder %v88, 32
    %v90 = vld [vmem:[#allocation2] sm:$0xff]
    %v91 = vld [vmem:[#allocation2 + $0x8] sm:$0xff]
    %v92 = vpack.c.bf16 %v91, %v90
    %v93 = vld [vmem:[%s1] sm:$0xf]
    %v94 = vld [vmem:[%s1 + $0x4] sm:$0xf]
    %v96 = vlaneseq
    %v97 = vshrl.u32 %v96, 7
    %v98 = vsub.s32 0, %v97
    %v99 = vrot.slane %v80, %v98
    %v103 = vunpack.c.l.b16 %v93
    %v104 = vunpack.c.l.b16 %v94
    %v105 = vpack.c.b16 %v104, %v103
    %vm107 = vcmask 130048
    %v109 = vsel %vm107, %v92, 0
    %111 = vmatprep.subr.bf16.mxu0 0
    %112 = vmatpush1.bf16.msra.mxu0 %v105
    %113 = vmatprep.subr.bf16.mxu0 0
    %114 = vmatpush1.bf16.msra.mxu0 0
    %115 = vmatprep.subr.bf16.mxu0 0
    %116 = vmatpush1.bf16.msra.mxu0 0
    %117 = vmatprep.subr.bf16.mxu0 0
    %118 = vmatpush1.bf16.msra.mxu0 0
    %119 = vmatprep.subr.bf16.mxu0 0
    %120 = vmatpush1.bf16.msra.mxu0 0
    %121 = vmatprep.subr.bf16.mxu0 0
    %122 = vmatpush1.bf16.msra.mxu0 0
    %123 = vmatprep.subr.bf16.mxu0 0
    %124 = vmatpush1.bf16.msra.mxu0 0
    %125 = vmatprep.subr.bf16.mxu0 0
    %126 = vmatpush1.bf16.msra.mxu0 0
    %127 = vmatprep.subr.bf16.mxu0 0
    %128 = vmatpush1.bf16.msra.mxu0 0
    %129 = vmatprep.subr.bf16.mxu0 0
    %130 = vmatpush1.bf16.msra.mxu0 0
    %131 = vmatprep.subr.bf16.mxu0 0
    %132 = vmatpush1.bf16.msra.mxu0 0
    %133 = vmatprep.subr.bf16.mxu0 0
    %134 = vmatpush1.bf16.msra.mxu0 0
    %135 = vmatprep.subr.bf16.mxu0 0
    %136 = vmatpush1.bf16.msra.mxu0 0
    %137 = vmatprep.subr.bf16.mxu0 0
    %138 = vmatpush1.bf16.msra.mxu0 0
    %139 = vmatprep.subr.bf16.mxu0 0
    %140 = vmatpush1.bf16.msra.mxu0 0
    %141 = vmatprep.subr.bf16.mxu0 0
    %142 = vmatpush1.bf16.msra.mxu0 0
    %143 = vmatprep.mubr.bf16.mxu0 0
    %144 = vmatmul.mubr.bf16.gmra.mrb[0].mxu0 %v109
    %v145 = vpop.f32.mrb[0].mxu0
    %v146 = vadd.f32 %v99, %v145
    %v147 = vpop.f32.mrb[0].mxu0
    %v148 = vpop.f32.mrb[0].mxu0
    %v149 = vadd.f32 %v99, %v148
    %v150 = vpop.f32.mrb[0].mxu0
    %151 = vdwg.mxu0
    %152 = vadd.xlane.f32.xlu0 %v146
    %v153 = vpop.xlane.xlu0 %152
    %154 = vadd.xlane.f32.xlu0 %v149
    %v155 = vpop.xlane.xlu0 %154
    %v156 = vmul.f32 %v153, 0.03125
    %v157 = vmul.f32 %v155, 0.03125
    %v158 = vsub.f32 %v146, %v156
    %v159 = vsub.f32 %v149, %v157
    %v160 = vsel %vm89, 1, 0
    %vm161 = vcmp.eq.s32.totalorder %v160, 1
    %v162 = vsel %vm161, %v158, 0.0
    %v163 = vsel %vm161, %v159, 0.0
    %v164 = vmul.f32 %v162, %v162
    %v165 = vmul.f32 %v163, %v163
    %166 = vadd.xlane.f32.xlu0 %v164
    %v167 = vpop.xlane.xlu0 %166
    %168 = vadd.xlane.f32.xlu0 %v165
    %v169 = vpop.xlane.xlu0 %168
    %v170 = vmul.f32 %v167, 0.03125
    %v171 = vmul.f32 %v169, 0.03125
    %v172 = vadd.f32 %v170, 1e-05
    %v173 = vadd.f32 %v171, 1e-05
    %v174 = vrsqrt.pop %v172
    %v175 = vrsqrt.pop %v173
    %v176 = vmul.f32 %v162, %v174
    %v177 = vmul.f32 %v163, %v175
    %v179 = vlaneseq
    %v180 = vshrl.u32 %v179, 7
    %v181 = vsub.s32 0, %v180
    %v182 = vrot.slane %v81, %v181
    %v184 = vmul.f32 %v176, %v182
    %v185 = vmul.f32 %v177, %v182
    %v187 = vlaneseq
    %v188 = vshrl.u32 %v187, 7
    %v189 = vsub.s32 0, %v188
    %v190 = vrot.slane %v82, %v189
    %v192 = vadd.f32 %v184, %v190
    %v193 = vadd.f32 %v185, %v190
    %v194 = vmul.f32 %v192, 0.5
    %v195 = vmul.f32 %v193, 0.5
    %v196 = vrcp.pop 1.4142135
    %v197 = vmul.f32 %v192, %v196
    %v198 = vmul.f32 %v193, %v196
    %v199 = verf.f32.pop %v197
    %v200 = verf.f32.pop %v198
    %v201 = vadd.f32 %v199, 1.0
    %v202 = vadd.f32 %v200, 1.0
    %v203 = vmul.f32 %v194, %v201
    %v204 = vmul.f32 %v195, %v202
    %v205 = vpack.c.bf16 %v204, %v203
    %v206 = vld [vmem:[#allocation4] sm:$0xf]
    %v207 = vld [vmem:[#allocation4 + $0x4] sm:$0xf]
    %v208 = vld [vmem:[#allocation4 + $0x8] sm:$0xf]
    %v209 = vld [vmem:[#allocation4 + $0xc] sm:$0xf]
    %v210 = vld [vmem:[#allocation4 + $0x10] sm:$0xf]
    %v211 = vld [vmem:[#allocation4 + $0x14] sm:$0xf]
    %v212 = vld [vmem:[#allocation4 + $0x18] sm:$0xf]
    %v213 = vld [vmem:[#allocation4 + $0x1c] sm:$0xf]
    %v214 = vld [vmem:[#allocation4 + $0x20] sm:$0xf]
    %v215 = vld [vmem:[#allocation4 + $0x24] sm:$0xf]
    %v216 = vld [vmem:[#allocation4 + $0x28] sm:$0xf]
    %v217 = vld [vmem:[#allocation4 + $0x2c] sm:$0xf]
    %v218 = vld [vmem:[#allocation4 + $0x30] sm:$0xf]
    %v219 = vld [vmem:[#allocation4 + $0x34] sm:$0xf]
    %v220 = vld [vmem:[#allocation4 + $0x38] sm:$0xf]
    %v221 = vld [vmem:[#allocation4 + $0x3c] sm:$0xf]
    %v223 = vlaneseq
    %v224 = vshrl.u32 %v223, 7
    %v225 = vsub.s32 0, %v224
    %v226 = vrot.slane %v83, %v225
    %v244 = vunpack.c.l.b16 %v206
    %v245 = vunpack.c.l.b16 %v207
    %v246 = vunpack.c.l.b16 %v208
    %v247 = vunpack.c.l.b16 %v209
    %v248 = vunpack.c.l.b16 %v210
    %v249 = vunpack.c.l.b16 %v211
    %v250 = vunpack.c.l.b16 %v212
    %v251 = vunpack.c.l.b16 %v213
    %v252 = vunpack.c.l.b16 %v214
    %v253 = vunpack.c.l.b16 %v215
    %v254 = vunpack.c.l.b16 %v216
    %v255 = vunpack.c.l.b16 %v217
    %v256 = vunpack.c.l.b16 %v218
    %v257 = vunpack.c.l.b16 %v219
    %v258 = vunpack.c.l.b16 %v220
    %v259 = vunpack.c.l.b16 %v221
    %v260 = vpack.c.b16 %v245, %v244
    %v261 = vpack.c.b16 %v247, %v246
    %v262 = vpack.c.b16 %v249, %v248
    %v263 = vpack.c.b16 %v251, %v250
    %v264 = vpack.c.b16 %v253, %v252
    %v265 = vpack.c.b16 %v255, %v254
    %v266 = vpack.c.b16 %v257, %v256
    %v267 = vpack.c.b16 %v259, %v258
    %276 = vmatprep.subr.bf16.mxu0 0
    %277 = vmatpush1.bf16.msra.mxu0 %v260
    %278 = vmatprep.subr.bf16.mxu0 0
    %279 = vmatpush1.bf16.msra.mxu0 %v261
    %280 = vmatprep.subr.bf16.mxu0 0
    %281 = vmatpush1.bf16.msra.mxu0 %v262
    %282 = vmatprep.subr.bf16.mxu0 0
    %283 = vmatpush1.bf16.msra.mxu0 %v263
    %284 = vmatprep.subr.bf16.mxu0 0
    %285 = vmatpush1.bf16.msra.mxu0 %v264
    %286 = vmatprep.subr.bf16.mxu0 0
    %287 = vmatpush1.bf16.msra.mxu0 %v265
    %288 = vmatprep.subr.bf16.mxu0 0
    %289 = vmatpush1.bf16.msra.mxu0 %v266
    %290 = vmatprep.subr.bf16.mxu0 0
    %291 = vmatpush1.bf16.msra.mxu0 %v267
    %292 = vmatprep.subr.bf16.mxu0 0
    %293 = vmatpush1.bf16.msra.mxu0 0
    %294 = vmatprep.subr.bf16.mxu0 0
    %295 = vmatpush1.bf16.msra.mxu0 0
    %296 = vmatprep.subr.bf16.mxu0 0
    %297 = vmatpush1.bf16.msra.mxu0 0
    %298 = vmatprep.subr.bf16.mxu0 0
    %299 = vmatpush1.bf16.msra.mxu0 0
    %300 = vmatprep.subr.bf16.mxu0 0
    %301 = vmatpush1.bf16.msra.mxu0 0
    %302 = vmatprep.subr.bf16.mxu0 0
    %303 = vmatpush1.bf16.msra.mxu0 0
    %304 = vmatprep.subr.bf16.mxu0 0
    %305 = vmatpush1.bf16.msra.mxu0 0
    %306 = vmatprep.subr.bf16.mxu0 0
    %307 = vmatpush1.bf16.msra.mxu0 0
    %308 = vmatprep.mubr.bf16.mxu0 0
    %309 = vmatmul.mubr.bf16.gmra.mrb[0].mxu0 %v205
    %v310 = vpop.f32.mrb[0].mxu0
    %v311 = vadd.f32 %v226, %v310
    %v312 = vpop.f32.mrb[0].mxu0
    %v313 = vpop.f32.mrb[0].mxu0
    %v314 = vadd.f32 %v226, %v313
    %v315 = vpop.f32.mrb[0].mxu0
    %316 = vdwg.mxu0
    %317 = vadd.xlane.f32.xlu0 %v311
    %v318 = vpop.xlane.xlu0 %317
    %319 = vadd.xlane.f32.xlu0 %v314
    %v320 = vpop.xlane.xlu0 %319
    %v321 = vmul.f32 %v318, 0.03125
    %v322 = vmul.f32 %v320, 0.03125
    %v323 = vsub.f32 %v311, %v321
    %v324 = vsub.f32 %v314, %v322
    %v325 = vsel %vm161, %v323, 0.0
    %v326 = vsel %vm161, %v324, 0.0
    %v327 = vmul.f32 %v325, %v325
    %v328 = vmul.f32 %v326, %v326
    %329 = vadd.xlane.f32.xlu0 %v327
    %v330 = vpop.xlane.xlu0 %329
    %331 = vadd.xlane.f32.xlu0 %v328
    %v332 = vpop.xlane.xlu0 %331
    %v333 = vmul.f32 %v330, 0.03125
    %v334 = vmul.f32 %v332, 0.03125
    %v335 = vadd.f32 %v333, 1e-05
    %v336 = vadd.f32 %v334, 1e-05
    %v337 = vrsqrt.pop %v335
    %v338 = vrsqrt.pop %v336
    %v339 = vmul.f32 %v325, %v337
    %v340 = vmul.f32 %v326, %v338
    %v342 = vlaneseq
    %v343 = vshrl.u32 %v342, 7
    %v344 = vsub.s32 0, %v343
    %v345 = vrot.slane %v84, %v344
    %v347 = vmul.f32 %v339, %v345
    %v348 = vmul.f32 %v340, %v345
    %v350 = vlaneseq
    %v351 = vshrl.u32 %v350, 7
    %v352 = vsub.s32 0, %v351
    %v353 = vrot.slane %v85, %v352
    %v355 = vadd.f32 %v347, %v353
    %v356 = vadd.f32 %v348, %v353
    %v357 = vmul.f32 %v355, 0.5
    %v358 = vmul.f32 %v356, 0.5
    %v359 = vmul.f32 %v355, %v196
    %v360 = vmul.f32 %v356, %v196
    %v361 = verf.f32.pop %v359
    %v362 = verf.f32.pop %v360
    %v363 = vadd.f32 %v361, 1.0
    %v364 = vadd.f32 %v362, 1.0
    %v365 = vmul.f32 %v357, %v363
    %v366 = vmul.f32 %v358, %v364
    %v367 = vpack.c.bf16 %v366, %v365
    %v368 = vld [vmem:[#allocation6] sm:$0xf]
    %v369 = vld [vmem:[#allocation6 + $0x4] sm:$0xf]
    %v370 = vld [vmem:[#allocation6 + $0x8] sm:$0xf]
    %v371 = vld [vmem:[#allocation6 + $0xc] sm:$0xf]
    %v372 = vld [vmem:[#allocation6 + $0x10] sm:$0xf]
    %v373 = vld [vmem:[#allocation6 + $0x14] sm:$0xf]
    %v374 = vld [vmem:[#allocation6 + $0x18] sm:$0xf]
    %v375 = vld [vmem:[#allocation6 + $0x1c] sm:$0xf]
    %v376 = vld [vmem:[#allocation6 + $0x20] sm:$0xf]
    %v377 = vld [vmem:[#allocation6 + $0x24] sm:$0xf]
    %v378 = vld [vmem:[#allocation6 + $0x28] sm:$0xf]
    %v379 = vld [vmem:[#allocation6 + $0x2c] sm:$0xf]
    %v380 = vld [vmem:[#allocation6 + $0x30] sm:$0xf]
    %v381 = vld [vmem:[#allocation6 + $0x34] sm:$0xf]
    %v382 = vld [vmem:[#allocation6 + $0x38] sm:$0xf]
    %v383 = vld [vmem:[#allocation6 + $0x3c] sm:$0xf]
    %v385 = vlaneseq
    %v386 = vshrl.u32 %v385, 7
    %v387 = vsub.s32 0, %v386
    %v388 = vrot.slane %v86, %v387
    %v406 = vunpack.c.l.b16 %v368
    %v407 = vunpack.c.l.b16 %v369
    %v408 = vunpack.c.l.b16 %v370
    %v409 = vunpack.c.l.b16 %v371
    %v410 = vunpack.c.l.b16 %v372
    %v411 = vunpack.c.l.b16 %v373
    %v412 = vunpack.c.l.b16 %v374
    %v413 = vunpack.c.l.b16 %v375
    %v414 = vunpack.c.l.b16 %v376
    %v415 = vunpack.c.l.b16 %v377
    %v416 = vunpack.c.l.b16 %v378
    %v417 = vunpack.c.l.b16 %v379
    %v418 = vunpack.c.l.b16 %v380
    %v419 = vunpack.c.l.b16 %v381
    %v420 = vunpack.c.l.b16 %v382
    %v421 = vunpack.c.l.b16 %v383
    %v422 = vpack.c.b16 %v407, %v406
    %v423 = vpack.c.b16 %v409, %v408
    %v424 = vpack.c.b16 %v411, %v410
    %v425 = vpack.c.b16 %v413, %v412
    %v426 = vpack.c.b16 %v415, %v414
    %v427 = vpack.c.b16 %v417, %v416
    %v428 = vpack.c.b16 %v419, %v418
    %v429 = vpack.c.b16 %v421, %v420
    %438 = vmatprep.subr.bf16.mxu0 0
    %439 = vmatpush1.bf16.msra.mxu0 %v422
    %440 = vmatprep.subr.bf16.mxu0 0
    %441 = vmatpush1.bf16.msra.mxu0 %v423
    %442 = vmatprep.subr.bf16.mxu0 0
    %443 = vmatpush1.bf16.msra.mxu0 %v424
    %444 = vmatprep.subr.bf16.mxu0 0
    %445 = vmatpush1.bf16.msra.mxu0 %v425
    %446 = vmatprep.subr.bf16.mxu0 0
    %447 = vmatpush1.bf16.msra.mxu0 %v426
    %448 = vmatprep.subr.bf16.mxu0 0
    %449 = vmatpush1.bf16.msra.mxu0 %v427
    %450 = vmatprep.subr.bf16.mxu0 0
    %451 = vmatpush1.bf16.msra.mxu0 %v428
    %452 = vmatprep.subr.bf16.mxu0 0
    %453 = vmatpush1.bf16.msra.mxu0 %v429
    %454 = vmatprep.subr.bf16.mxu0 0
    %455 = vmatpush1.bf16.msra.mxu0 0
    %456 = vmatprep.subr.bf16.mxu0 0
    %457 = vmatpush1.bf16.msra.mxu0 0
    %458 = vmatprep.subr.bf16.mxu0 0
    %459 = vmatpush1.bf16.msra.mxu0 0
    %460 = vmatprep.subr.bf16.mxu0 0
    %461 = vmatpush1.bf16.msra.mxu0 0
    %462 = vmatprep.subr.bf16.mxu0 0
    %463 = vmatpush1.bf16.msra.mxu0 0
    %464 = vmatprep.subr.bf16.mxu0 0
    %465 = vmatpush1.bf16.msra.mxu0 0
    %466 = vmatprep.subr.bf16.mxu0 0
    %467 = vmatpush1.bf16.msra.mxu0 0
    %468 = vmatprep.subr.bf16.mxu0 0
    %469 = vmatpush1.bf16.msra.mxu0 0
    %470 = vmatprep.mubr.bf16.mxu0 0
    %471 = vmatmul.mubr.bf16.gmra.mrb[0].mxu0 %v367
    %v472 = vpop.f32.mrb[0].mxu0
    %v473 = vadd.f32 %v388, %v472
    %v474 = vpop.f32.mrb[0].mxu0
    %v475 = vpop.f32.mrb[0].mxu0
    %v476 = vadd.f32 %v388, %v475
    %v477 = vpop.f32.mrb[0].mxu0
    %478 = vdwg.mxu0
    %479 = vst [vmem:[%s11] sm:$0xff] %v473
    %480 = vst [vmem:[%s11 + $0x8] sm:$0xff] %v476
    // Predicated region
    $region58: #{actor_forward.1} parent=1 // pred_check
      _
    $region59: #{actor_forward.1} parent=1 // pred_check_branch
      %482 = sbr.rel (0) target = $region61
    $region60: #{actor_forward.1} parent=1 // pred_region
      _
    $region61: #{actor_forward.1} parent=1 // pred_fallthru
      _
    // Predicated region
    $region62: #{actor_forward.1} parent=1 // pred_check
      _
    $region63: #{actor_forward.1} parent=1 // pred_check_branch
      %484 = sbr.rel (0) target = $region65
    $region64: #{actor_forward.1} parent=1 // pred_region
      _
    $region65: #{actor_forward.1} parent=1 // pred_fallthru
      _
    %485 = vsyncpa [#allocation3], 1
    %486 = vsyncpa [#allocation5], 1

</llo_original>
